<compile_context>
chip_gen: v7x
topology: tpu7x:2x2x1
jax: 0.10.0
libtpu: 0.0.40
codegen_flags: <defaults>
</compile_context>

<pallas_src>
import jax
import jax.numpy as jnp
from jax import lax
from jax.experimental import pallas as pl
from jax.experimental.pallas import tpu as pltpu


# ----------------------------------------------------------------------------
# Pallas kernel: whole forward in one invocation.
#   gates_x = reshape(x, (B*T, E)) @ W_ih^T + (b_ih + b_hh)        (one MXU call)
#   for t in 0..T-1 (unrolled):
#       gates = gates_x[:, t] + h_{t-1} @ W_hh^T
#       i,f,g,o split; c_t = f*c + i*g; h_t = o*tanh(c_t); stash h_t
#   out = sigmoid(reshape(h_hist, (B*T, H)) @ W_r^T + b_r)          (one MXU call)
# ----------------------------------------------------------------------------
def lstm_classifier_kernel(x_ref, wih_ref, whh_ref, b_ref, wr_ref, br_ref,
                           o_ref, hh_ref):
    B, T, E = x_ref.shape
    H = whh_ref.shape[0]
    R = wr_ref.shape[1]

    # ---- hoisted input projection for all time steps at once ---------------
    x_flat = x_ref[...].reshape(B * T, E)                              # (B*T, E)
    gx = (jnp.dot(x_flat, wih_ref[...], preferred_element_type=jnp.float32)
          + b_ref[...])                                                # (B*T, 4H)
    gx = gx.reshape(B, T, 4 * H)

    whh = whh_ref[...]                                                 # (H, 4H)

    # ---- fully unrolled time recurrence (serial path: one matmul per step) --
    h = jnp.zeros((B, H), jnp.float32)
    c = jnp.zeros((B, H), jnp.float32)
    for t in range(T):  # static unroll; gives the scheduler the whole recurrence
        gates = gx[:, t, :] + jnp.dot(h, whh,
                                      preferred_element_type=jnp.float32)
        i_g = jax.nn.sigmoid(gates[:, 0 * H:1 * H])
        f_g = jax.nn.sigmoid(gates[:, 1 * H:2 * H])
        g_g = jnp.tanh(gates[:, 2 * H:3 * H])
        o_g = jax.nn.sigmoid(gates[:, 3 * H:4 * H])
        c = f_g * c + i_g * g_g
        h = o_g * jnp.tanh(c)
        hh_ref[:, t:t + 1, :] = h.reshape(B, 1, H)

    # ---- batched h2r projection + sigmoid, single contiguous writeback ------
    h_all = hh_ref[...].reshape(B * T, H)                              # (B*T, H)
    out = jax.nn.sigmoid(
        jnp.dot(h_all, wr_ref[...], preferred_element_type=jnp.float32)
        + br_ref[...])                                                 # (B*T, R)
    o_ref[...] = out.reshape(B, T, R)


def classifier_forward_pallas(x_btE, params):
    """x_btE: (B, T, E) batch-first input (float32). Returns (B, T, R)."""
    wih_t, whh_t, b_comb, wr_t, br = params
    B, T, E = x_btE.shape
    H = whh_t.shape[0]
    R = wr_t.shape[1]

    # No grid: everything (x, weights, output) is VMEM resident in one shot;
    # only a VMEM scratch for the h_t history is needed.
    return pl.pallas_call(
        lstm_classifier_kernel,
        out_shape=jax.ShapeDtypeStruct((B, T, R), jnp.float32),
        scratch_shapes=[pltpu.VMEM((B, T, H), jnp.float32)],  # h history
    )(x_btE, wih_t, whh_t, b_comb, wr_t, br)


# ----------------------------------------------------------------------------
# Pure-JAX reference (for correctness check against the kernel).
# ----------------------------------------------------------------------------
def classifier_forward_ref(x_btE, params):
    wih_t, whh_t, b_comb, wr_t, br = params
    B, T, E = x_btE.shape
    H = whh_t.shape[0]
    x_tbE = jnp.transpose(x_btE, (1, 0, 2))

    def step(carry, x_t):
        h, c = carry
        gates = x_t @ wih_t + h @ whh_t + b_comb
        i_g, f_g, g_g, o_g = jnp.split(gates, 4, axis=-1)
        c = jax.nn.sigmoid(f_g) * c + jax.nn.sigmoid(i_g) * jnp.tanh(g_g)
        h = jax.nn.sigmoid(o_g) * jnp.tanh(c)
        return (h, c), h

    init = (jnp.zeros((B, H), jnp.float32), jnp.zeros((B, H), jnp.float32))
    _, hs = lax.scan(step, init, x_tbE)                   # (T, B, H)
    out = jax.nn.sigmoid(hs @ wr_t + br)                  # (T, B, R)
    return jnp.transpose(out, (1, 0, 2))


def make_params(key, embedding_size, hidden_size, reduction_size):
    """Deterministic synthetic parameters, PyTorch LSTM/Linear shapes."""
    k = jax.random.split(key, 6)
    H, E, R = hidden_size, embedding_size, reduction_size
    scale = 1.0 / jnp.sqrt(H)
    w_ih = jax.random.uniform(k[0], (4 * H, E), jnp.float32, -scale, scale)
    w_hh = jax.random.uniform(k[1], (4 * H, H), jnp.float32, -scale, scale)
    b_ih = jax.random.uniform(k[2], (4 * H,), jnp.float32, -scale, scale)
    b_hh = jax.random.uniform(k[3], (4 * H,), jnp.float32, -scale, scale)
    w_r = jax.random.uniform(k[4], (R, H), jnp.float32, -scale, scale)
    b_r = jax.random.uniform(k[5], (R,), jnp.float32, -scale, scale)
    # Pre-transpose for the kernel; combine the two LSTM biases.
    return (
        jnp.asarray(w_ih.T),                         # (E, 4H)
        jnp.asarray(w_hh.T),                         # (H, 4H)
        (b_ih + b_hh).reshape(1, 4 * H),             # (1, 4H)
        jnp.asarray(w_r.T),                          # (H, R)
        b_r.reshape(1, R),                           # (1, R)
    )


if __name__ == "__main__":
    # Classifier(hidden_size=32, embedding_size=16, reduction_size=8,
    #            num_layers=1, biLSTM=False)
    hidden_size, embedding_size, reduction_size = 32, 16, 8
    batch, seq = 2, 8
    lengths = [8, 6]  # sorted descending, as pack_padded_sequence requires

    key = jax.random.PRNGKey(0)
    pkey, xkey = jax.random.split(key)
    params = make_params(pkey, embedding_size, hidden_size, reduction_size)

    # Padded batch-first input (B, T, E); positions >= length are zero padding.
    x = jax.random.normal(xkey, (batch, seq, embedding_size), jnp.float32)
    pad_mask = (jnp.arange(seq)[None, :] < jnp.asarray(lengths)[:, None])
    x = x * pad_mask[:, :, None].astype(jnp.float32)

    out_full = classifier_forward_pallas(x, params)          # (B, T, R)
    out_full = jax.block_until_ready(out_full)

    # Trim per sequence length (the module returns a python list of tensors).
    trimmed_outputs = [out_full[i, :lengths[i], :] for i in range(batch)]

    # Correctness check vs. pure-JAX LSTM reference on the valid region.
    ref_full = classifier_forward_ref(x, params)
    for i in range(batch):
        assert jnp.allclose(
            trimmed_outputs[i], ref_full[i, :lengths[i], :], atol=1e-5, rtol=1e-5
        ), f"mismatch in sequence {i}"

    print("KERNEL_OK")
</pallas_src>

<mosaic_0001>
module attributes {stable_mosaic.version = 11 : i64} {
  func.func @lstm_classifier_kernel(%arg0: memref<2x8x16xf32, #tpu.memory_space<vmem>>, %arg1: memref<16x128xf32, #tpu.memory_space<vmem>>, %arg2: memref<32x128xf32, #tpu.memory_space<vmem>>, %arg3: memref<1x128xf32, #tpu.memory_space<vmem>>, %arg4: memref<32x8xf32, #tpu.memory_space<vmem>>, %arg5: memref<1x8xf32, #tpu.memory_space<vmem>>, %arg6: memref<2x8x8xf32, #tpu.memory_space<vmem>>, %arg7: memref<2x8x32xf32, #tpu.memory_space<vmem>>) attributes {dimension_semantics = [], scalar_prefetch = 0 : i64, scratch_operands = 1 : i64, tpu.core_type = #tpu.core_type<tc>} {
    %c0 = arith.constant 0 : index
    %c0_0 = arith.constant 0 : index
    %c0_1 = arith.constant 0 : index
    %0 = vector.load %arg0[%c0, %c0_0, %c0_1] : memref<2x8x16xf32, #tpu.memory_space<vmem>>, vector<2x8x16xf32>
    %1 = vector.shape_cast %0 : vector<2x8x16xf32> to vector<16x16xf32>
    %c0_2 = arith.constant 0 : index
    %c0_3 = arith.constant 0 : index
    %2 = vector.load %arg1[%c0_2, %c0_3] : memref<16x128xf32, #tpu.memory_space<vmem>>, vector<16x128xf32>
    %cst = arith.constant dense<0.000000e+00> : vector<16x128xf32>
    %3 = tpu.matmul %1, %2, %cst {dimension_numbers = #tpu.dot_dimension_numbers<[1], [0], [0], [1], [0, 0, 1, 1], [], []>} : vector<16x16xf32>, vector<16x128xf32>, vector<16x128xf32> -> vector<16x128xf32>
    %c0_4 = arith.constant 0 : index
    %c0_5 = arith.constant 0 : index
    %4 = vector.load %arg3[%c0_4, %c0_5] : memref<1x128xf32, #tpu.memory_space<vmem>>, vector<1x128xf32>
    %5 = vector.broadcast %4 : vector<1x128xf32> to vector<16x128xf32>
    %6 = arith.addf %3, %5 : vector<16x128xf32>
    %7 = vector.shape_cast %6 : vector<16x128xf32> to vector<2x8x128xf32>
    %c0_6 = arith.constant 0 : index
    %c0_7 = arith.constant 0 : index
    %8 = vector.load %arg2[%c0_6, %c0_7] : memref<32x128xf32, #tpu.memory_space<vmem>>, vector<32x128xf32>
    %cst_8 = arith.constant 0.000000e+00 : f32
    %9 = vector.broadcast %cst_8 : f32 to vector<2x32xf32>
    %cst_9 = arith.constant 0.000000e+00 : f32
    %10 = vector.broadcast %cst_9 : f32 to vector<2x32xf32>
    %11 = vector.extract_strided_slice %7 {offsets = [0, 0, 0], sizes = [2, 1, 128], strides = [1, 1, 1]} : vector<2x8x128xf32> to vector<2x1x128xf32>
    %12 = vector.shape_cast %11 : vector<2x1x128xf32> to vector<2x128xf32>
    %cst_10 = arith.constant dense<0.000000e+00> : vector<2x128xf32>
    %13 = tpu.matmul %9, %8, %cst_10 {dimension_numbers = #tpu.dot_dimension_numbers<[1], [0], [0], [1], [0, 0, 1, 1], [], []>} : vector<2x32xf32>, vector<32x128xf32>, vector<2x128xf32> -> vector<2x128xf32>
    %14 = arith.addf %12, %13 : vector<2x128xf32>
    %15 = vector.extract_strided_slice %14 {offsets = [0, 0], sizes = [2, 32], strides = [1, 1]} : vector<2x128xf32> to vector<2x32xf32>
    %16 = arith.negf %15 : vector<2x32xf32>
    %17 = math.exp %16 : vector<2x32xf32>
    %cst_11 = arith.constant 1.000000e+00 : f32
    %18 = vector.broadcast %cst_11 : f32 to vector<2x32xf32>
    %19 = arith.addf %18, %17 : vector<2x32xf32>
    %20 = arith.divf %18, %19 : vector<2x32xf32>
    %21 = vector.extract_strided_slice %14 {offsets = [0, 32], sizes = [2, 32], strides = [1, 1]} : vector<2x128xf32> to vector<2x32xf32>
    %22 = arith.negf %21 : vector<2x32xf32>
    %23 = math.exp %22 : vector<2x32xf32>
    %cst_12 = arith.constant 1.000000e+00 : f32
    %24 = vector.broadcast %cst_12 : f32 to vector<2x32xf32>
    %25 = arith.addf %24, %23 : vector<2x32xf32>
    %26 = arith.divf %24, %25 : vector<2x32xf32>
    %27 = vector.extract_strided_slice %14 {offsets = [0, 64], sizes = [2, 32], strides = [1, 1]} : vector<2x128xf32> to vector<2x32xf32>
    %28 = math.tanh %27 : vector<2x32xf32>
    %29 = vector.extract_strided_slice %14 {offsets = [0, 96], sizes = [2, 32], strides = [1, 1]} : vector<2x128xf32> to vector<2x32xf32>
    %30 = arith.negf %29 : vector<2x32xf32>
    %31 = math.exp %30 : vector<2x32xf32>
    %cst_13 = arith.constant 1.000000e+00 : f32
    %32 = vector.broadcast %cst_13 : f32 to vector<2x32xf32>
    %33 = arith.addf %32, %31 : vector<2x32xf32>
    %34 = arith.divf %32, %33 : vector<2x32xf32>
    %35 = arith.mulf %26, %10 : vector<2x32xf32>
    %36 = arith.mulf %20, %28 : vector<2x32xf32>
    %37 = arith.addf %35, %36 : vector<2x32xf32>
    %38 = math.tanh %37 : vector<2x32xf32>
    %39 = arith.mulf %34, %38 : vector<2x32xf32>
    %40 = vector.shape_cast %39 : vector<2x32xf32> to vector<2x1x32xf32>
    %c0_14 = arith.constant 0 : index
    %c0_15 = arith.constant 0 : index
    %c0_16 = arith.constant 0 : index
    %41 = vector.load %arg7[%c0_14, %c0_15, %c0_16] : memref<2x8x32xf32, #tpu.memory_space<vmem>>, vector<2x1x32xf32>
    tpu.vector_store %arg7[%c0_14, %c0_15, %c0_16], %40 {strides = array<i32>} : memref<2x8x32xf32, #tpu.memory_space<vmem>>, vector<2x1x32xf32>,
    %42 = vector.extract_strided_slice %7 {offsets = [0, 1, 0], sizes = [2, 1, 128], strides = [1, 1, 1]} : vector<2x8x128xf32> to vector<2x1x128xf32>
    %43 = vector.shape_cast %42 : vector<2x1x128xf32> to vector<2x128xf32>
    %cst_17 = arith.constant dense<0.000000e+00> : vector<2x128xf32>
    %44 = tpu.matmul %39, %8, %cst_17 {dimension_numbers = #tpu.dot_dimension_numbers<[1], [0], [0], [1], [0, 0, 1, 1], [], []>} : vector<2x32xf32>, vector<32x128xf32>, vector<2x128xf32> -> vector<2x128xf32>
    %45 = arith.addf %43, %44 : vector<2x128xf32>
    %46 = vector.extract_strided_slice %45 {offsets = [0, 0], sizes = [2, 32], strides = [1, 1]} : vector<2x128xf32> to vector<2x32xf32>
    %47 = arith.negf %46 : vector<2x32xf32>
    %48 = math.exp %47 : vector<2x32xf32>
    %cst_18 = arith.constant 1.000000e+00 : f32
    %49 = vector.broadcast %cst_18 : f32 to vector<2x32xf32>
    %50 = arith.addf %49, %48 : vector<2x32xf32>
    %51 = arith.divf %49, %50 : vector<2x32xf32>
    %52 = vector.extract_strided_slice %45 {offsets = [0, 32], sizes = [2, 32], strides = [1, 1]} : vector<2x128xf32> to vector<2x32xf32>
    %53 = arith.negf %52 : vector<2x32xf32>
    %54 = math.exp %53 : vector<2x32xf32>
    %cst_19 = arith.constant 1.000000e+00 : f32
    %55 = vector.broadcast %cst_19 : f32 to vector<2x32xf32>
    %56 = arith.addf %55, %54 : vector<2x32xf32>
    %57 = arith.divf %55, %56 : vector<2x32xf32>
    %58 = vector.extract_strided_slice %45 {offsets = [0, 64], sizes = [2, 32], strides = [1, 1]} : vector<2x128xf32> to vector<2x32xf32>
    %59 = math.tanh %58 : vector<2x32xf32>
    %60 = vector.extract_strided_slice %45 {offsets = [0, 96], sizes = [2, 32], strides = [1, 1]} : vector<2x128xf32> to vector<2x32xf32>
    %61 = arith.negf %60 : vector<2x32xf32>
    %62 = math.exp %61 : vector<2x32xf32>
    %cst_20 = arith.constant 1.000000e+00 : f32
    %63 = vector.broadcast %cst_20 : f32 to vector<2x32xf32>
    %64 = arith.addf %63, %62 : vector<2x32xf32>
    %65 = arith.divf %63, %64 : vector<2x32xf32>
    %66 = arith.mulf %57, %37 : vector<2x32xf32>
    %67 = arith.mulf %51, %59 : vector<2x32xf32>
    %68 = arith.addf %66, %67 : vector<2x32xf32>
    %69 = math.tanh %68 : vector<2x32xf32>
    %70 = arith.mulf %65, %69 : vector<2x32xf32>
    %71 = vector.shape_cast %70 : vector<2x32xf32> to vector<2x1x32xf32>
    %c0_21 = arith.constant 0 : index
    %c1 = arith.constant 1 : index
    %c0_22 = arith.constant 0 : index
    %72 = vector.load %arg7[%c0_21, %c1, %c0_22] : memref<2x8x32xf32, #tpu.memory_space<vmem>>, vector<2x1x32xf32>
    tpu.vector_store %arg7[%c0_21, %c1, %c0_22], %71 {strides = array<i32>} : memref<2x8x32xf32, #tpu.memory_space<vmem>>, vector<2x1x32xf32>,
    %73 = vector.extract_strided_slice %7 {offsets = [0, 2, 0], sizes = [2, 1, 128], strides = [1, 1, 1]} : vector<2x8x128xf32> to vector<2x1x128xf32>
    %74 = vector.shape_cast %73 : vector<2x1x128xf32> to vector<2x128xf32>
    %cst_23 = arith.constant dense<0.000000e+00> : vector<2x128xf32>
    %75 = tpu.matmul %70, %8, %cst_23 {dimension_numbers = #tpu.dot_dimension_numbers<[1], [0], [0], [1], [0, 0, 1, 1], [], []>} : vector<2x32xf32>, vector<32x128xf32>, vector<2x128xf32> -> vector<2x128xf32>
    %76 = arith.addf %74, %75 : vector<2x128xf32>
    %77 = vector.extract_strided_slice %76 {offsets = [0, 0], sizes = [2, 32], strides = [1, 1]} : vector<2x128xf32> to vector<2x32xf32>
    %78 = arith.negf %77 : vector<2x32xf32>
    %79 = math.exp %78 : vector<2x32xf32>
    %cst_24 = arith.constant 1.000000e+00 : f32
    %80 = vector.broadcast %cst_24 : f32 to vector<2x32xf32>
    %81 = arith.addf %80, %79 : vector<2x32xf32>
    %82 = arith.divf %80, %81 : vector<2x32xf32>
    %83 = vector.extract_strided_slice %76 {offsets = [0, 32], sizes = [2, 32], strides = [1, 1]} : vector<2x128xf32> to vector<2x32xf32>
    %84 = arith.negf %83 : vector<2x32xf32>
    %85 = math.exp %84 : vector<2x32xf32>
    %cst_25 = arith.constant 1.000000e+00 : f32
    %86 = vector.broadcast %cst_25 : f32 to vector<2x32xf32>
    %87 = arith.addf %86, %85 : vector<2x32xf32>
    %88 = arith.divf %86, %87 : vector<2x32xf32>
    %89 = vector.extract_strided_slice %76 {offsets = [0, 64], sizes = [2, 32], strides = [1, 1]} : vector<2x128xf32> to vector<2x32xf32>
    %90 = math.tanh %89 : vector<2x32xf32>
    %91 = vector.extract_strided_slice %76 {offsets = [0, 96], sizes = [2, 32], strides = [1, 1]} : vector<2x128xf32> to vector<2x32xf32>
    %92 = arith.negf %91 : vector<2x32xf32>
    %93 = math.exp %92 : vector<2x32xf32>
    %cst_26 = arith.constant 1.000000e+00 : f32
    %94 = vector.broadcast %cst_26 : f32 to vector<2x32xf32>
    %95 = arith.addf %94, %93 : vector<2x32xf32>
    %96 = arith.divf %94, %95 : vector<2x32xf32>
    %97 = arith.mulf %88, %68 : vector<2x32xf32>
    %98 = arith.mulf %82, %90 : vector<2x32xf32>
    %99 = arith.addf %97, %98 : vector<2x32xf32>
    %100 = math.tanh %99 : vector<2x32xf32>
    %101 = arith.mulf %96, %100 : vector<2x32xf32>
    %102 = vector.shape_cast %101 : vector<2x32xf32> to vector<2x1x32xf32>
    %c0_27 = arith.constant 0 : index
    %c2 = arith.constant 2 : index
    %c0_28 = arith.constant 0 : index
    %103 = vector.load %arg7[%c0_27, %c2, %c0_28] : memref<2x8x32xf32, #tpu.memory_space<vmem>>, vector<2x1x32xf32>
    tpu.vector_store %arg7[%c0_27, %c2, %c0_28], %102 {strides = array<i32>} : memref<2x8x32xf32, #tpu.memory_space<vmem>>, vector<2x1x32xf32>,
    %104 = vector.extract_strided_slice %7 {offsets = [0, 3, 0], sizes = [2, 1, 128], strides = [1, 1, 1]} : vector<2x8x128xf32> to vector<2x1x128xf32>
    %105 = vector.shape_cast %104 : vector<2x1x128xf32> to vector<2x128xf32>
    %cst_29 = arith.constant dense<0.000000e+00> : vector<2x128xf32>
    %106 = tpu.matmul %101, %8, %cst_29 {dimension_numbers = #tpu.dot_dimension_numbers<[1], [0], [0], [1], [0, 0, 1, 1], [], []>} : vector<2x32xf32>, vector<32x128xf32>, vector<2x128xf32> -> vector<2x128xf32>
    %107 = arith.addf %105, %106 : vector<2x128xf32>
    %108 = vector.extract_strided_slice %107 {offsets = [0, 0], sizes = [2, 32], strides = [1, 1]} : vector<2x128xf32> to vector<2x32xf32>
    %109 = arith.negf %108 : vector<2x32xf32>
    %110 = math.exp %109 : vector<2x32xf32>
    %cst_30 = arith.constant 1.000000e+00 : f32
    %111 = vector.broadcast %cst_30 : f32 to vector<2x32xf32>
    %112 = arith.addf %111, %110 : vector<2x32xf32>
    %113 = arith.divf %111, %112 : vector<2x32xf32>
    %114 = vector.extract_strided_slice %107 {offsets = [0, 32], sizes = [2, 32], strides = [1, 1]} : vector<2x128xf32> to vector<2x32xf32>
    %115 = arith.negf %114 : vector<2x32xf32>
    %116 = math.exp %115 : vector<2x32xf32>
    %cst_31 = arith.constant 1.000000e+00 : f32
    %117 = vector.broadcast %cst_31 : f32 to vector<2x32xf32>
    %118 = arith.addf %117, %116 : vector<2x32xf32>
    %119 = arith.divf %117, %118 : vector<2x32xf32>
    %120 = vector.extract_strided_slice %107 {offsets = [0, 64], sizes = [2, 32], strides = [1, 1]} : vector<2x128xf32> to vector<2x32xf32>
    %121 = math.tanh %120 : vector<2x32xf32>
    %122 = vector.extract_strided_slice %107 {offsets = [0, 96], sizes = [2, 32], strides = [1, 1]} : vector<2x128xf32> to vector<2x32xf32>
    %123 = arith.negf %122 : vector<2x32xf32>
    %124 = math.exp %123 : vector<2x32xf32>
    %cst_32 = arith.constant 1.000000e+00 : f32
    %125 = vector.broadcast %cst_32 : f32 to vector<2x32xf32>
    %126 = arith.addf %125, %124 : vector<2x32xf32>
    %127 = arith.divf %125, %126 : vector<2x32xf32>
    %128 = arith.mulf %119, %99 : vector<2x32xf32>
    %129 = arith.mulf %113, %121 : vector<2x32xf32>
    %130 = arith.addf %128, %129 : vector<2x32xf32>
    %131 = math.tanh %130 : vector<2x32xf32>
    %132 = arith.mulf %127, %131 : vector<2x32xf32>
    %133 = vector.shape_cast %132 : vector<2x32xf32> to vector<2x1x32xf32>
    %c0_33 = arith.constant 0 : index
    %c3 = arith.constant 3 : index
    %c0_34 = arith.constant 0 : index
    %134 = vector.load %arg7[%c0_33, %c3, %c0_34] : memref<2x8x32xf32, #tpu.memory_space<vmem>>, vector<2x1x32xf32>
    tpu.vector_store %arg7[%c0_33, %c3, %c0_34], %133 {strides = array<i32>} : memref<2x8x32xf32, #tpu.memory_space<vmem>>, vector<2x1x32xf32>,
    %135 = vector.extract_strided_slice %7 {offsets = [0, 4, 0], sizes = [2, 1, 128], strides = [1, 1, 1]} : vector<2x8x128xf32> to vector<2x1x128xf32>
    %136 = vector.shape_cast %135 : vector<2x1x128xf32> to vector<2x128xf32>
    %cst_35 = arith.constant dense<0.000000e+00> : vector<2x128xf32>
    %137 = tpu.matmul %132, %8, %cst_35 {dimension_numbers = #tpu.dot_dimension_numbers<[1], [0], [0], [1], [0, 0, 1, 1], [], []>} : vector<2x32xf32>, vector<32x128xf32>, vector<2x128xf32> -> vector<2x128xf32>
    %138 = arith.addf %136, %137 : vector<2x128xf32>
    %139 = vector.extract_strided_slice %138 {offsets = [0, 0], sizes = [2, 32], strides = [1, 1]} : vector<2x128xf32> to vector<2x32xf32>
    %140 = arith.negf %139 : vector<2x32xf32>
    %141 = math.exp %140 : vector<2x32xf32>
    %cst_36 = arith.constant 1.000000e+00 : f32
    %142 = vector.broadcast %cst_36 : f32 to vector<2x32xf32>
    %143 = arith.addf %142, %141 : vector<2x32xf32>
    %144 = arith.divf %142, %143 : vector<2x32xf32>
    %145 = vector.extract_strided_slice %138 {offsets = [0, 32], sizes = [2, 32], strides = [1, 1]} : vector<2x128xf32> to vector<2x32xf32>
    %146 = arith.negf %145 : vector<2x32xf32>
    %147 = math.exp %146 : vector<2x32xf32>
    %cst_37 = arith.constant 1.000000e+00 : f32
    %148 = vector.broadcast %cst_37 : f32 to vector<2x32xf32>
    %149 = arith.addf %148, %147 : vector<2x32xf32>
    %150 = arith.divf %148, %149 : vector<2x32xf32>
    %151 = vector.extract_strided_slice %138 {offsets = [0, 64], sizes = [2, 32], strides = [1, 1]} : vector<2x128xf32> to vector<2x32xf32>
    %152 = math.tanh %151 : vector<2x32xf32>
    %153 = vector.extract_strided_slice %138 {offsets = [0, 96], sizes = [2, 32], strides = [1, 1]} : vector<2x128xf32> to vector<2x32xf32>
    %154 = arith.negf %153 : vector<2x32xf32>
    %155 = math.exp %154 : vector<2x32xf32>
    %cst_38 = arith.constant 1.000000e+00 : f32
    %156 = vector.broadcast %cst_38 : f32 to vector<2x32xf32>
    %157 = arith.addf %156, %155 : vector<2x32xf32>
    %158 = arith.divf %156, %157 : vector<2x32xf32>
    %159 = arith.mulf %150, %130 : vector<2x32xf32>
    %160 = arith.mulf %144, %152 : vector<2x32xf32>
    %161 = arith.addf %159, %160 : vector<2x32xf32>
    %162 = math.tanh %161 : vector<2x32xf32>
    %163 = arith.mulf %158, %162 : vector<2x32xf32>
    %164 = vector.shape_cast %163 : vector<2x32xf32> to vector<2x1x32xf32>
    %c0_39 = arith.constant 0 : index
    %c4 = arith.constant 4 : index
    %c0_40 = arith.constant 0 : index
    %165 = vector.load %arg7[%c0_39, %c4, %c0_40] : memref<2x8x32xf32, #tpu.memory_space<vmem>>, vector<2x1x32xf32>
    tpu.vector_store %arg7[%c0_39, %c4, %c0_40], %164 {strides = array<i32>} : memref<2x8x32xf32, #tpu.memory_space<vmem>>, vector<2x1x32xf32>,
    %166 = vector.extract_strided_slice %7 {offsets = [0, 5, 0], sizes = [2, 1, 128], strides = [1, 1, 1]} : vector<2x8x128xf32> to vector<2x1x128xf32>
    %167 = vector.shape_cast %166 : vector<2x1x128xf32> to vector<2x128xf32>
    %cst_41 = arith.constant dense<0.000000e+00> : vector<2x128xf32>
    %168 = tpu.matmul %163, %8, %cst_41 {dimension_numbers = #tpu.dot_dimension_numbers<[1], [0], [0], [1], [0, 0, 1, 1], [], []>} : vector<2x32xf32>, vector<32x128xf32>, vector<2x128xf32> -> vector<2x128xf32>
    %169 = arith.addf %167, %168 : vector<2x128xf32>
    %170 = vector.extract_strided_slice %169 {offsets = [0, 0], sizes = [2, 32], strides = [1, 1]} : vector<2x128xf32> to vector<2x32xf32>
    %171 = arith.negf %170 : vector<2x32xf32>
    %172 = math.exp %171 : vector<2x32xf32>
    %cst_42 = arith.constant 1.000000e+00 : f32
    %173 = vector.broadcast %cst_42 : f32 to vector<2x32xf32>
    %174 = arith.addf %173, %172 : vector<2x32xf32>
    %175 = arith.divf %173, %174 : vector<2x32xf32>
    %176 = vector.extract_strided_slice %169 {offsets = [0, 32], sizes = [2, 32], strides = [1, 1]} : vector<2x128xf32> to vector<2x32xf32>
    %177 = arith.negf %176 : vector<2x32xf32>
    %178 = math.exp %177 : vector<2x32xf32>
    %cst_43 = arith.constant 1.000000e+00 : f32
    %179 = vector.broadcast %cst_43 : f32 to vector<2x32xf32>
    %180 = arith.addf %179, %178 : vector<2x32xf32>
    %181 = arith.divf %179, %180 : vector<2x32xf32>
    %182 = vector.extract_strided_slice %169 {offsets = [0, 64], sizes = [2, 32], strides = [1, 1]} : vector<2x128xf32> to vector<2x32xf32>
    %183 = math.tanh %182 : vector<2x32xf32>
    %184 = vector.extract_strided_slice %169 {offsets = [0, 96], sizes = [2, 32], strides = [1, 1]} : vector<2x128xf32> to vector<2x32xf32>
    %185 = arith.negf %184 : vector<2x32xf32>
    %186 = math.exp %185 : vector<2x32xf32>
    %cst_44 = arith.constant 1.000000e+00 : f32
    %187 = vector.broadcast %cst_44 : f32 to vector<2x32xf32>
    %188 = arith.addf %187, %186 : vector<2x32xf32>
    %189 = arith.divf %187, %188 : vector<2x32xf32>
    %190 = arith.mulf %181, %161 : vector<2x32xf32>
    %191 = arith.mulf %175, %183 : vector<2x32xf32>
    %192 = arith.addf %190, %191 : vector<2x32xf32>
    %193 = math.tanh %192 : vector<2x32xf32>
    %194 = arith.mulf %189, %193 : vector<2x32xf32>
    %195 = vector.shape_cast %194 : vector<2x32xf32> to vector<2x1x32xf32>
    %c0_45 = arith.constant 0 : index
    %c5 = arith.constant 5 : index
    %c0_46 = arith.constant 0 : index
    %196 = vector.load %arg7[%c0_45, %c5, %c0_46] : memref<2x8x32xf32, #tpu.memory_space<vmem>>, vector<2x1x32xf32>
    tpu.vector_store %arg7[%c0_45, %c5, %c0_46], %195 {strides = array<i32>} : memref<2x8x32xf32, #tpu.memory_space<vmem>>, vector<2x1x32xf32>,
    %197 = vector.extract_strided_slice %7 {offsets = [0, 6, 0], sizes = [2, 1, 128], strides = [1, 1, 1]} : vector<2x8x128xf32> to vector<2x1x128xf32>
    %198 = vector.shape_cast %197 : vector<2x1x128xf32> to vector<2x128xf32>
    %cst_47 = arith.constant dense<0.000000e+00> : vector<2x128xf32>
    %199 = tpu.matmul %194, %8, %cst_47 {dimension_numbers = #tpu.dot_dimension_numbers<[1], [0], [0], [1], [0, 0, 1, 1], [], []>} : vector<2x32xf32>, vector<32x128xf32>, vector<2x128xf32> -> vector<2x128xf32>
    %200 = arith.addf %198, %199 : vector<2x128xf32>
    %201 = vector.extract_strided_slice %200 {offsets = [0, 0], sizes = [2, 32], strides = [1, 1]} : vector<2x128xf32> to vector<2x32xf32>
    %202 = arith.negf %201 : vector<2x32xf32>
    %203 = math.exp %202 : vector<2x32xf32>
    %cst_48 = arith.constant 1.000000e+00 : f32
    %204 = vector.broadcast %cst_48 : f32 to vector<2x32xf32>
    %205 = arith.addf %204, %203 : vector<2x32xf32>
    %206 = arith.divf %204, %205 : vector<2x32xf32>
    %207 = vector.extract_strided_slice %200 {offsets = [0, 32], sizes = [2, 32], strides = [1, 1]} : vector<2x128xf32> to vector<2x32xf32>
    %208 = arith.negf %207 : vector<2x32xf32>
    %209 = math.exp %208 : vector<2x32xf32>
    %cst_49 = arith.constant 1.000000e+00 : f32
    %210 = vector.broadcast %cst_49 : f32 to vector<2x32xf32>
    %211 = arith.addf %210, %209 : vector<2x32xf32>
    %212 = arith.divf %210, %211 : vector<2x32xf32>
    %213 = vector.extract_strided_slice %200 {offsets = [0, 64], sizes = [2, 32], strides = [1, 1]} : vector<2x128xf32> to vector<2x32xf32>
    %214 = math.tanh %213 : vector<2x32xf32>
    %215 = vector.extract_strided_slice %200 {offsets = [0, 96], sizes = [2, 32], strides = [1, 1]} : vector<2x128xf32> to vector<2x32xf32>
    %216 = arith.negf %215 : vector<2x32xf32>
    %217 = math.exp %216 : vector<2x32xf32>
    %cst_50 = arith.constant 1.000000e+00 : f32
    %218 = vector.broadcast %cst_50 : f32 to vector<2x32xf32>
    %219 = arith.addf %218, %217 : vector<2x32xf32>
    %220 = arith.divf %218, %219 : vector<2x32xf32>
    %221 = arith.mulf %212, %192 : vector<2x32xf32>
    %222 = arith.mulf %206, %214 : vector<2x32xf32>
    %223 = arith.addf %221, %222 : vector<2x32xf32>
    %224 = math.tanh %223 : vector<2x32xf32>
    %225 = arith.mulf %220, %224 : vector<2x32xf32>
    %226 = vector.shape_cast %225 : vector<2x32xf32> to vector<2x1x32xf32>
    %c0_51 = arith.constant 0 : index
    %c6 = arith.constant 6 : index
    %c0_52 = arith.constant 0 : index
    %227 = vector.load %arg7[%c0_51, %c6, %c0_52] : memref<2x8x32xf32, #tpu.memory_space<vmem>>, vector<2x1x32xf32>
    tpu.vector_store %arg7[%c0_51, %c6, %c0_52], %226 {strides = array<i32>} : memref<2x8x32xf32, #tpu.memory_space<vmem>>, vector<2x1x32xf32>,
    %228 = vector.extract_strided_slice %7 {offsets = [0, 7, 0], sizes = [2, 1, 128], strides = [1, 1, 1]} : vector<2x8x128xf32> to vector<2x1x128xf32>
    %229 = vector.shape_cast %228 : vector<2x1x128xf32> to vector<2x128xf32>
    %cst_53 = arith.constant dense<0.000000e+00> : vector<2x128xf32>
    %230 = tpu.matmul %225, %8, %cst_53 {dimension_numbers = #tpu.dot_dimension_numbers<[1], [0], [0], [1], [0, 0, 1, 1], [], []>} : vector<2x32xf32>, vector<32x128xf32>, vector<2x128xf32> -> vector<2x128xf32>
    %231 = arith.addf %229, %230 : vector<2x128xf32>
    %232 = vector.extract_strided_slice %231 {offsets = [0, 0], sizes = [2, 32], strides = [1, 1]} : vector<2x128xf32> to vector<2x32xf32>
    %233 = arith.negf %232 : vector<2x32xf32>
    %234 = math.exp %233 : vector<2x32xf32>
    %cst_54 = arith.constant 1.000000e+00 : f32
    %235 = vector.broadcast %cst_54 : f32 to vector<2x32xf32>
    %236 = arith.addf %235, %234 : vector<2x32xf32>
    %237 = arith.divf %235, %236 : vector<2x32xf32>
    %238 = vector.extract_strided_slice %231 {offsets = [0, 32], sizes = [2, 32], strides = [1, 1]} : vector<2x128xf32> to vector<2x32xf32>
    %239 = arith.negf %238 : vector<2x32xf32>
    %240 = math.exp %239 : vector<2x32xf32>
    %cst_55 = arith.constant 1.000000e+00 : f32
    %241 = vector.broadcast %cst_55 : f32 to vector<2x32xf32>
    %242 = arith.addf %241, %240 : vector<2x32xf32>
    %243 = arith.divf %241, %242 : vector<2x32xf32>
    %244 = vector.extract_strided_slice %231 {offsets = [0, 64], sizes = [2, 32], strides = [1, 1]} : vector<2x128xf32> to vector<2x32xf32>
    %245 = math.tanh %244 : vector<2x32xf32>
    %246 = vector.extract_strided_slice %231 {offsets = [0, 96], sizes = [2, 32], strides = [1, 1]} : vector<2x128xf32> to vector<2x32xf32>
    %247 = arith.negf %246 : vector<2x32xf32>
    %248 = math.exp %247 : vector<2x32xf32>
    %cst_56 = arith.constant 1.000000e+00 : f32
    %249 = vector.broadcast %cst_56 : f32 to vector<2x32xf32>
    %250 = arith.addf %249, %248 : vector<2x32xf32>
    %251 = arith.divf %249, %250 : vector<2x32xf32>
    %252 = arith.mulf %243, %223 : vector<2x32xf32>
    %253 = arith.mulf %237, %245 : vector<2x32xf32>
    %254 = arith.addf %252, %253 : vector<2x32xf32>
    %255 = math.tanh %254 : vector<2x32xf32>
    %256 = arith.mulf %251, %255 : vector<2x32xf32>
    %257 = vector.shape_cast %256 : vector<2x32xf32> to vector<2x1x32xf32>
    %c0_57 = arith.constant 0 : index
    %c7 = arith.constant 7 : index
    %c0_58 = arith.constant 0 : index
    %258 = vector.load %arg7[%c0_57, %c7, %c0_58] : memref<2x8x32xf32, #tpu.memory_space<vmem>>, vector<2x1x32xf32>
    tpu.vector_store %arg7[%c0_57, %c7, %c0_58], %257 {strides = array<i32>} : memref<2x8x32xf32, #tpu.memory_space<vmem>>, vector<2x1x32xf32>,
    %c0_59 = arith.constant 0 : index
    %c0_60 = arith.constant 0 : index
    %c0_61 = arith.constant 0 : index
    %259 = vector.load %arg7[%c0_59, %c0_60, %c0_61] : memref<2x8x32xf32, #tpu.memory_space<vmem>>, vector<2x8x32xf32>
    %260 = vector.shape_cast %259 : vector<2x8x32xf32> to vector<16x32xf32>
    %c0_62 = arith.constant 0 : index
    %c0_63 = arith.constant 0 : index
    %261 = vector.load %arg4[%c0_62, %c0_63] : memref<32x8xf32, #tpu.memory_space<vmem>>, vector<32x8xf32>
    %cst_64 = arith.constant dense<0.000000e+00> : vector<16x8xf32>
    %262 = tpu.matmul %260, %261, %cst_64 {dimension_numbers = #tpu.dot_dimension_numbers<[1], [0], [0], [1], [0, 0, 1, 1], [], []>} : vector<16x32xf32>, vector<32x8xf32>, vector<16x8xf32> -> vector<16x8xf32>
    %c0_65 = arith.constant 0 : index
    %c0_66 = arith.constant 0 : index
    %263 = vector.load %arg5[%c0_65, %c0_66] : memref<1x8xf32, #tpu.memory_space<vmem>>, vector<1x8xf32>
    %264 = vector.broadcast %263 : vector<1x8xf32> to vector<16x8xf32>
    %265 = arith.addf %262, %264 : vector<16x8xf32>
    %266 = arith.negf %265 : vector<16x8xf32>
    %267 = math.exp %266 : vector<16x8xf32>
    %cst_67 = arith.constant 1.000000e+00 : f32
    %268 = vector.broadcast %cst_67 : f32 to vector<16x8xf32>
    %269 = arith.addf %268, %267 : vector<16x8xf32>
    %270 = arith.divf %268, %269 : vector<16x8xf32>
    %271 = vector.shape_cast %270 : vector<16x8xf32> to vector<2x8x8xf32>
    %c0_68 = arith.constant 0 : index
    %c0_69 = arith.constant 0 : index
    %c0_70 = arith.constant 0 : index
    %272 = vector.load %arg6[%c0_68, %c0_69, %c0_70] : memref<2x8x8xf32, #tpu.memory_space<vmem>>, vector<2x8x8xf32>
    tpu.vector_store %arg6[%c0_68, %c0_69, %c0_70], %271 {strides = array<i32>} : memref<2x8x8xf32, #tpu.memory_space<vmem>>, vector<2x8x8xf32>,
    return
  }
}

</mosaic_0001>

<llo_original>
// kernel: tpu_custom_call.1
$region0: #{tpu_custom_call.1}
  #allocation0 [shape = 'u32[]', space=smem, size = 0x4, offset = 0x4, fixed_abs, tag = 'smem constant byte address 0x4 - core index']
  #allocation1 [shape = 'u32[144,128]{1,0:T(1,128)}', space=vmem, size = 0x12000, scoped, tag = 'internal scratch']
  #allocation2 [shape = 'f32[2,8,32]{2,1,0:T(8,128)}', space=vmem, size = 0x2000, scoped, tag = 'scratch operand']
  %s0 = inlined_call_operand.hbm [shape: f32[2,8,16], index: 0, kind: input, shape index: {}]
  %s1 = inlined_call_operand.hbm [shape: f32[16,128], index: 1, kind: input, shape index: {}]
  %s2 = inlined_call_operand.vmem [shape: f32[32,128], index: 2, kind: input, shape index: {}]
  %s3 = inlined_call_operand.vmem [shape: f32[1,128], index: 3, kind: input, shape index: {}]
  %s4 = inlined_call_operand.vmem [shape: f32[32,8], index: 4, kind: input, shape index: {}]
  %s5 = inlined_call_operand.vmem [shape: f32[1,8], index: 5, kind: input, shape index: {}]
  %s6 = inlined_call_operand.hbm [shape: f32[2,8,8], index: 6, kind: output, shape index: {}]
  %s7 = sld [smem:[#allocation0]]
  $region42: #{tpu_custom_call.1} parent=0
    _
  %s9 = ssub.s32 1, %s7
  %s10 = scalar_select 0, %s9, %s7
  $region1: #{tpu_custom_call.1} parent=0
    #allocation3 [shape = 'u8[8192]{0}', space=vmem, size = 0x2000, scoped, tag = 'input window, operand 0, single buffered']
    #allocation4 [shape = 's32[1]{0}', space=sflag, size = 0x4, scoped, tag = 'scoped memory for tpu_custom_call.1']
    #allocation5 [shape = 's32[1]{0}', space=sflag, size = 0x4, scoped, tag = 'scoped memory for tpu_custom_call.1']
    #allocation6 [shape = 'u8[8192]{0}', space=vmem, size = 0x2000, scoped, tag = 'input window, operand 1, single buffered']
    #allocation7 [shape = 's32[1]{0}', space=sflag, size = 0x4, scoped, tag = 'scoped memory for tpu_custom_call.1']
    #allocation8 [shape = 'u8[8192]{0}', space=vmem, size = 0x2000, scoped, tag = 'output window, operand 0, single buffered']
    %11 = vsyncpa [#allocation4], 0
    %12 = vsyncpa [#allocation7], 0
    %13 = vsyncpa [#allocation5], 0
    // Predicated region
    $region2: #{tpu_custom_call.1} parent=1 // pred_check
      _
    $region3: #{tpu_custom_call.1} parent=1 // pred_check_branch
      %15 = sbr.rel (0) target = $region5
    $region4: #{tpu_custom_call.1} parent=1 // pred_region
      %s17 = ssub.s32 256, 256
      %18 = vsyncadd [#allocation4], %s17
      %s19 = sshll.u32 [#allocation3], 4
      %s20 = int_to_ptr.vmem [resolvable:$true] %s19
      %25 = dma.hbm_to_vmem [thread:$0]  %s0, 256, %s20, [#allocation4], 128, 128, 8
    $region5: #{tpu_custom_call.1} parent=1 // pred_fallthru
      _
    // Predicated region
    $region6: #{tpu_custom_call.1} parent=1 // pred_check
      _
    $region7: #{tpu_custom_call.1} parent=1 // pred_check_branch
      %27 = sbr.rel (0) target = $region9
    $region8: #{tpu_custom_call.1} parent=1 // pred_region
      %s29 = ssub.s32 256, 256
      %30 = vsyncadd [#allocation7], %s29
      %s31 = sshll.u32 [#allocation6], 4
      %s32 = int_to_ptr.vmem [resolvable:$true] %s31
      %37 = dma.hbm_to_vmem [thread:$0]  %s1, 256, %s32, [#allocation7], 128, 128, 8
    $region9: #{tpu_custom_call.1} parent=1 // pred_fallthru
      _
    // Predicated region
    $region10: #{tpu_custom_call.1} parent=1 // pred_check
      _
    $region11: #{tpu_custom_call.1} parent=1 // pred_check_branch
      %39 = sbr.rel (0) target = $region13
    $region12: #{tpu_custom_call.1} parent=1 // pred_region
      _
    $region13: #{tpu_custom_call.1} parent=1 // pred_fallthru
      _
    // Predicated region
    $region14: #{tpu_custom_call.1} parent=1 // pred_check
      _
    $region15: #{tpu_custom_call.1} parent=1 // pred_check_branch
      %41 = sbr.rel (0) target = $region17
    $region16: #{tpu_custom_call.1} parent=1 // pred_region
      _
    $region17: #{tpu_custom_call.1} parent=1 // pred_fallthru
      _
    // Predicated region
    $region18: #{tpu_custom_call.1} parent=1 // pred_check
      _
    $region19: #{tpu_custom_call.1} parent=1 // pred_check_branch
      %43 = sbr.rel (0) target = $region21
    $region20: #{tpu_custom_call.1} parent=1 // pred_region
      _
    $region21: #{tpu_custom_call.1} parent=1 // pred_fallthru
      _
    // Predicated region
    $region22: #{tpu_custom_call.1} parent=1 // pred_check
      _
    $region23: #{tpu_custom_call.1} parent=1 // pred_check_branch
      %45 = sbr.rel (0) target = $region25
    $region24: #{tpu_custom_call.1} parent=1 // pred_region
      _
    $region25: #{tpu_custom_call.1} parent=1 // pred_fallthru
      _
    // Predicated region
    $region26: #{tpu_custom_call.1} parent=1 // pred_check
      _
    $region27: #{tpu_custom_call.1} parent=1 // pred_check_branch
      %47 = sbr.rel (0) target = $region29
    $region28: #{tpu_custom_call.1} parent=1 // pred_region
      %48 = dma.done [#allocation4], 256
    $region29: #{tpu_custom_call.1} parent=1 // pred_fallthru
      _
    // Predicated region
    $region30: #{tpu_custom_call.1} parent=1 // pred_check
      _
    $region31: #{tpu_custom_call.1} parent=1 // pred_check_branch
      %50 = sbr.rel (0) target = $region33
    $region32: #{tpu_custom_call.1} parent=1 // pred_region
      %51 = dma.done [#allocation7], 256
    $region33: #{tpu_custom_call.1} parent=1 // pred_fallthru
      _
    %v52 = vld [vmem:[#allocation3] sm:$0xff]
    %v53 = vld [vmem:[#allocation3 + $0x8] sm:$0xff]
    %v54 = vld [vmem:[#allocation6] sm:$0xff]
    %v55 = vld [vmem:[#allocation6 + $0x8] sm:$0xff]
    %v56 = vld [vmem:[%s3] sm:$0x1]
    %v58 = vlaneseq
    %v59 = vshrl.u32 %v58, 7
    %v60 = vsub.s32 0, %v59
    %v61 = vrot.slane %v56, %v60
    %vm63 = vcmask 130048
    %v65 = vsel %vm63, %v52, 0
    %v68 = vsel %vm63, %v53, 0
    %70 = vmatprep.subr.mxu0 0.0
    %71 = vmatpush1.msra.mxu0 %v54
    %72 = vmatprep.subr.mxu0 0.0
    %73 = vmatpush1.msra.mxu0 %v55
    %74 = vmatprep.subr.mxu0 0.0
    %75 = vmatpush1.msra.mxu0 0.0
    %76 = vmatprep.subr.mxu0 0.0
    %77 = vmatpush1.msra.mxu0 0.0
    %78 = vmatprep.subr.mxu0 0.0
    %79 = vmatpush1.msra.mxu0 0.0
    %80 = vmatprep.subr.mxu0 0.0
    %81 = vmatpush1.msra.mxu0 0.0
    %82 = vmatprep.subr.mxu0 0.0
    %83 = vmatpush1.msra.mxu0 0.0
    %84 = vmatprep.subr.mxu0 0.0
    %85 = vmatpush1.msra.mxu0 0.0
    %86 = vmatprep.subr.mxu0 0.0
    %87 = vmatpush1.msra.mxu0 0.0
    %88 = vmatprep.subr.mxu0 0.0
    %89 = vmatpush1.msra.mxu0 0.0
    %90 = vmatprep.subr.mxu0 0.0
    %91 = vmatpush1.msra.mxu0 0.0
    %92 = vmatprep.subr.mxu0 0.0
    %93 = vmatpush1.msra.mxu0 0.0
    %94 = vmatprep.subr.mxu0 0.0
    %95 = vmatpush1.msra.mxu0 0.0
    %96 = vmatprep.subr.mxu0 0.0
    %97 = vmatpush1.msra.mxu0 0.0
    %98 = vmatprep.subr.mxu0 0.0
    %99 = vmatpush1.msra.mxu0 0.0
    %100 = vmatprep.subr.mxu0 0.0
    %101 = vmatpush1.msra.mxu0 0.0
    %102 = vmatprep.subr.mxu0 0.0
    %103 = vmatpush1.msra.mxu0 0.0
    %104 = vmatprep.subr.mxu0 0.0
    %105 = vmatpush1.msra.mxu0 0.0
    %106 = vmatprep.subr.mxu0 0.0
    %107 = vmatpush1.msra.mxu0 0.0
    %108 = vmatprep.subr.mxu0 0.0
    %109 = vmatpush1.msra.mxu0 0.0
    %110 = vmatprep.subr.mxu0 0.0
    %111 = vmatpush1.msra.mxu0 0.0
    %112 = vmatprep.subr.mxu0 0.0
    %113 = vmatpush1.msra.mxu0 0.0
    %114 = vmatprep.subr.mxu0 0.0
    %115 = vmatpush1.msra.mxu0 0.0
    %116 = vmatprep.subr.mxu0 0.0
    %117 = vmatpush1.msra.mxu0 0.0
    %118 = vmatprep.subr.mxu0 0.0
    %119 = vmatpush1.msra.mxu0 0.0
    %120 = vmatprep.subr.mxu0 0.0
    %121 = vmatpush1.msra.mxu0 0.0
    %122 = vmatprep.subr.mxu0 0.0
    %123 = vmatpush1.msra.mxu0 0.0
    %124 = vmatprep.subr.mxu0 0.0
    %125 = vmatpush1.msra.mxu0 0.0
    %126 = vmatprep.subr.mxu0 0.0
    %127 = vmatpush1.msra.mxu0 0.0
    %128 = vmatprep.subr.mxu0 0.0
    %129 = vmatpush1.msra.mxu0 0.0
    %130 = vmatprep.subr.mxu0 0.0
    %131 = vmatpush1.msra.mxu0 0.0
    %132 = vmatprep.subr.mxu0 0.0
    %133 = vmatpush1.msra.mxu0 0.0
    %134 = vmatprep.mubr.f32.mxu0 0.0
    %135 = vmatmul.mubr.f32.gmra.mrb[0].mxu0 %v65
    %v136 = vpop.f32.mrb[0].mxu0
    %v137 = vadd.f32 %v61, %v136
    %v138 = vpop.f32.mrb[0].mxu0
    %139 = vmatprep.mubr.f32.mxu0 0.0
    %140 = vmatmul.mubr.f32.gmra.mrb[0].mxu0 %v68
    %v141 = vpop.f32.mrb[0].mxu0
    %v142 = vadd.f32 %v61, %v141
    %v143 = vpop.f32.mrb[0].mxu0
    %144 = vdwg.mxu0
    %v145 = vld [vmem:[%s2] sm:$0xff]
    %v146 = vld [vmem:[%s2 + $0x8] sm:$0xff]
    %v147 = vld [vmem:[%s2 + $0x10] sm:$0xff]
    %v148 = vld [vmem:[%s2 + $0x18] sm:$0xff]
    %vm149 = vcmask 261120
    %v151 = vsel %vm149, 0.0, 0
    %153 = vmatprep.subr.mxu0 0.0
    %154 = vmatpush1.msra.mxu0 %v145
    %155 = vmatprep.subr.mxu0 0.0
    %156 = vmatpush1.msra.mxu0 %v146
    %157 = vmatprep.subr.mxu0 0.0
    %158 = vmatpush1.msra.mxu0 %v147
    %159 = vmatprep.subr.mxu0 0.0
    %160 = vmatpush1.msra.mxu0 %v148
    %161 = vmatprep.subr.mxu0 0.0
    %162 = vmatpush1.msra.mxu0 0.0
    %163 = vmatprep.subr.mxu0 0.0
    %164 = vmatpush1.msra.mxu0 0.0
    %165 = vmatprep.subr.mxu0 0.0
    %166 = vmatpush1.msra.mxu0 0.0
    %167 = vmatprep.subr.mxu0 0.0
    %168 = vmatpush1.msra.mxu0 0.0
    %169 = vmatprep.subr.mxu0 0.0
    %170 = vmatpush1.msra.mxu0 0.0
    %171 = vmatprep.subr.mxu0 0.0
    %172 = vmatpush1.msra.mxu0 0.0
    %173 = vmatprep.subr.mxu0 0.0
    %174 = vmatpush1.msra.mxu0 0.0
    %175 = vmatprep.subr.mxu0 0.0
    %176 = vmatpush1.msra.mxu0 0.0
    %177 = vmatprep.subr.mxu0 0.0
    %178 = vmatpush1.msra.mxu0 0.0
    %179 = vmatprep.subr.mxu0 0.0
    %180 = vmatpush1.msra.mxu0 0.0
    %181 = vmatprep.subr.mxu0 0.0
    %182 = vmatpush1.msra.mxu0 0.0
    %183 = vmatprep.subr.mxu0 0.0
    %184 = vmatpush1.msra.mxu0 0.0
    %185 = vmatprep.subr.mxu0 0.0
    %186 = vmatpush1.msra.mxu0 0.0
    %187 = vmatprep.subr.mxu0 0.0
    %188 = vmatpush1.msra.mxu0 0.0
    %189 = vmatprep.subr.mxu0 0.0
    %190 = vmatpush1.msra.mxu0 0.0
    %191 = vmatprep.subr.mxu0 0.0
    %192 = vmatpush1.msra.mxu0 0.0
    %193 = vmatprep.subr.mxu0 0.0
    %194 = vmatpush1.msra.mxu0 0.0
    %195 = vmatprep.subr.mxu0 0.0
    %196 = vmatpush1.msra.mxu0 0.0
    %197 = vmatprep.subr.mxu0 0.0
    %198 = vmatpush1.msra.mxu0 0.0
    %199 = vmatprep.subr.mxu0 0.0
    %200 = vmatpush1.msra.mxu0 0.0
    %201 = vmatprep.subr.mxu0 0.0
    %202 = vmatpush1.msra.mxu0 0.0
    %203 = vmatprep.subr.mxu0 0.0
    %204 = vmatpush1.msra.mxu0 0.0
    %205 = vmatprep.subr.mxu0 0.0
    %206 = vmatpush1.msra.mxu0 0.0
    %207 = vmatprep.subr.mxu0 0.0
    %208 = vmatpush1.msra.mxu0 0.0
    %209 = vmatprep.subr.mxu0 0.0
    %210 = vmatpush1.msra.mxu0 0.0
    %211 = vmatprep.subr.mxu0 0.0
    %212 = vmatpush1.msra.mxu0 0.0
    %213 = vmatprep.subr.mxu0 0.0
    %214 = vmatpush1.msra.mxu0 0.0
    %215 = vmatprep.subr.mxu0 0.0
    %216 = vmatpush1.msra.mxu0 0.0
    %217 = vmatprep.mubr.f32.mxu0 0.0
    %218 = vmatmul.mubr.f32.gmra.mrb[0].mxu0 %v151
    %v219 = vpop.f32.mrb[0].mxu0
    %v220 = vadd.f32 0.0, %v219
    %v221 = vpop.f32.mrb[0].mxu0
    %222 = vdwg.mxu0
    %v224 = vrot.slane %v220, 1
    %v227 = vadd.f32 %v137, %v220
    %v228 = vadd.f32 %v142, %v224
    %v229 = vxor.u32 %v227, 2147483648
    %v230 = vxor.u32 %v228, 2147483648
    %v231 = vmul.f32 %v229, 1.442695
    %v232 = vpow.pop %v231
    %v233 = vmul.f32 %v230, 1.442695
    %v234 = vpow.pop %v233
    %v235 = vadd.f32 %v232, 1.0
    %v236 = vadd.f32 %v234, 1.0
    %v237 = vrcp.pop %v235
    %v238 = vmul.f32 1.0, %v237
    %v239 = vrcp.pop %v236
    %v240 = vmul.f32 1.0, %v239
    %v241 = vtanh.pop %v227
    %v242 = vtanh.pop %v228
    %v243 = vmul.f32 %v238, 0.0
    %v244 = vmul.f32 %v240, 0.0
    %247 = vrot.lane.b32.xlu0 %v241, 64
    %v248 = vpop.permute.xlu0 %247
    %249 = vrot.lane.b32.xlu0 %v242, 64
    %v250 = vpop.permute.xlu0 %249
    %v253 = vmul.f32 %v238, %v248
    %v254 = vmul.f32 %v240, %v250
    %257 = vrot.lane.b32.xlu0 %v253, 32
    %v258 = vpop.permute.xlu0 %257
    %259 = vrot.lane.b32.xlu0 %v254, 32
    %v260 = vpop.permute.xlu0 %259
    %v263 = vadd.f32 %v243, %v258
    %v264 = vadd.f32 %v244, %v260
    %v265 = vtanh.pop %v263
    %v266 = vtanh.pop %v264
    %269 = vrot.lane.b32.xlu0 %v265, 64
    %v270 = vpop.permute.xlu0 %269
    %271 = vrot.lane.b32.xlu0 %v266, 64
    %v272 = vpop.permute.xlu0 %271
    %v275 = vmul.f32 %v238, %v270
    %v276 = vmul.f32 %v240, %v272
    %279 = vrot.lane.b32.xlu0 %v275, 32
    %v280 = vpop.permute.xlu0 %279
    %281 = vrot.lane.b32.xlu0 %v276, 32
    %v282 = vpop.permute.xlu0 %281
    %vm285 = vcmask 253952
    %286 = vst.msk [vmem:[#allocation2] sm:$0x1] %vm285, %v280
    %287 = vst.msk [vmem:[#allocation2 + $0x8] sm:$0x1] %vm285, %v282
    %v288 = vrot.slane %v276, 7
    %vm289 = vcmask 1041409
    %v290 = vsel %vm289, %v288, %v275
    %291 = vrot.lane.b32.xlu0 %v290, 32
    %v292 = vpop.permute.xlu0 %291
    %v293 = vsel %vm149, %v292, 0
    %295 = vmatprep.subr.mxu0 0.0
    %296 = vmatpush1.msra.mxu0 %v145
    %297 = vmatprep.subr.mxu0 0.0
    %298 = vmatpush1.msra.mxu0 %v146
    %299 = vmatprep.subr.mxu0 0.0
    %300 = vmatpush1.msra.mxu0 %v147
    %301 = vmatprep.subr.mxu0 0.0
    %302 = vmatpush1.msra.mxu0 %v148
    %303 = vmatprep.subr.mxu0 0.0
    %304 = vmatpush1.msra.mxu0 0.0
    %305 = vmatprep.subr.mxu0 0.0
    %306 = vmatpush1.msra.mxu0 0.0
    %307 = vmatprep.subr.mxu0 0.0
    %308 = vmatpush1.msra.mxu0 0.0
    %309 = vmatprep.subr.mxu0 0.0
    %310 = vmatpush1.msra.mxu0 0.0
    %311 = vmatprep.subr.mxu0 0.0
    %312 = vmatpush1.msra.mxu0 0.0
    %313 = vmatprep.subr.mxu0 0.0
    %314 = vmatpush1.msra.mxu0 0.0
    %315 = vmatprep.subr.mxu0 0.0
    %316 = vmatpush1.msra.mxu0 0.0
    %317 = vmatprep.subr.mxu0 0.0
    %318 = vmatpush1.msra.mxu0 0.0
    %319 = vmatprep.subr.mxu0 0.0
    %320 = vmatpush1.msra.mxu0 0.0
    %321 = vmatprep.subr.mxu0 0.0
    %322 = vmatpush1.msra.mxu0 0.0
    %323 = vmatprep.subr.mxu0 0.0
    %324 = vmatpush1.msra.mxu0 0.0
    %325 = vmatprep.subr.mxu0 0.0
    %326 = vmatpush1.msra.mxu0 0.0
    %327 = vmatprep.subr.mxu0 0.0
    %328 = vmatpush1.msra.mxu0 0.0
    %329 = vmatprep.subr.mxu0 0.0
    %330 = vmatpush1.msra.mxu0 0.0
    %331 = vmatprep.subr.mxu0 0.0
    %332 = vmatpush1.msra.mxu0 0.0
    %333 = vmatprep.subr.mxu0 0.0
    %334 = vmatpush1.msra.mxu0 0.0
    %335 = vmatprep.subr.mxu0 0.0
    %336 = vmatpush1.msra.mxu0 0.0
    %337 = vmatprep.subr.mxu0 0.0
    %338 = vmatpush1.msra.mxu0 0.0
    %339 = vmatprep.subr.mxu0 0.0
    %340 = vmatpush1.msra.mxu0 0.0
    %341 = vmatprep.subr.mxu0 0.0
    %342 = vmatpush1.msra.mxu0 0.0
    %343 = vmatprep.subr.mxu0 0.0
    %344 = vmatpush1.msra.mxu0 0.0
    %345 = vmatprep.subr.mxu0 0.0
    %346 = vmatpush1.msra.mxu0 0.0
    %347 = vmatprep.subr.mxu0 0.0
    %348 = vmatpush1.msra.mxu0 0.0
    %349 = vmatprep.subr.mxu0 0.0
    %350 = vmatpush1.msra.mxu0 0.0
    %351 = vmatprep.subr.mxu0 0.0
    %352 = vmatpush1.msra.mxu0 0.0
    %353 = vmatprep.subr.mxu0 0.0
    %354 = vmatpush1.msra.mxu0 0.0
    %355 = vmatprep.subr.mxu0 0.0
    %356 = vmatpush1.msra.mxu0 0.0
    %357 = vmatprep.subr.mxu0 0.0
    %358 = vmatpush1.msra.mxu0 0.0
    %359 = vmatprep.mubr.f32.mxu0 0.0
    %360 = vmatmul.mubr.f32.gmra.mrb[0].mxu0 %v293
    %v361 = vpop.f32.mrb[0].mxu0
    %v362 = vadd.f32 0.0, %v361
    %v363 = vpop.f32.mrb[0].mxu0
    %364 = vdwg.mxu0
    %v366 = vrot.slane %v362, 7
    %v369 = vadd.f32 %v137, %v366
    %v370 = vadd.f32 %v142, %v362
    %v371 = vxor.u32 %v369, 2147483648
    %v372 = vxor.u32 %v370, 2147483648
    %v373 = vmul.f32 %v371, 1.442695
    %v374 = vpow.pop %v373
    %v375 = vmul.f32 %v372, 1.442695
    %v376 = vpow.pop %v375
    %v377 = vadd.f32 %v374, 1.0
    %v378 = vadd.f32 %v376, 1.0
    %v379 = vrcp.pop %v377
    %v380 = vmul.f32 1.0, %v379
    %v381 = vrcp.pop %v378
    %v382 = vmul.f32 1.0, %v381
    %v383 = vtanh.pop %v369
    %v384 = vtanh.pop %v370
    %v387 = vrot.slane %v263, 7
    %v388 = vrot.slane %v264, 7
    %v391 = vmul.f32 %v380, %v387
    %v392 = vmul.f32 %v382, %v388
    %395 = vrot.lane.b32.xlu0 %v383, 64
    %v396 = vpop.permute.xlu0 %395
    %397 = vrot.lane.b32.xlu0 %v384, 64
    %v398 = vpop.permute.xlu0 %397
    %v401 = vmul.f32 %v380, %v396
    %v402 = vmul.f32 %v382, %v398
    %405 = vrot.lane.b32.xlu0 %v401, 32
    %v406 = vpop.permute.xlu0 %405
    %407 = vrot.lane.b32.xlu0 %v402, 32
    %v408 = vpop.permute.xlu0 %407
    %v411 = vadd.f32 %v391, %v406
    %v412 = vadd.f32 %v392, %v408
    %v413 = vtanh.pop %v411
    %v414 = vtanh.pop %v412
    %417 = vrot.lane.b32.xlu0 %v413, 64
    %v418 = vpop.permute.xlu0 %417
    %419 = vrot.lane.b32.xlu0 %v414, 64
    %v420 = vpop.permute.xlu0 %419
    %v423 = vmul.f32 %v380, %v418
    %v424 = vmul.f32 %v382, %v420
    %427 = vrot.lane.b32.xlu0 %v423, 32
    %v428 = vpop.permute.xlu0 %427
    %429 = vrot.lane.b32.xlu0 %v424, 32
    %v430 = vpop.permute.xlu0 %429
    %vm433 = vcmask 254977
    %434 = vst.msk [vmem:[#allocation2] sm:$0x2] %vm433, %v428
    %435 = vst.msk [vmem:[#allocation2 + $0x8] sm:$0x2] %vm433, %v430
    %v436 = vrot.slane %v423, 1
    %v437 = vsel %vm289, %v424, %v436
    %438 = vrot.lane.b32.xlu0 %v437, 32
    %v439 = vpop.permute.xlu0 %438
    %v440 = vsel %vm149, %v439, 0
    %442 = vmatprep.subr.mxu0 0.0
    %443 = vmatpush1.msra.mxu0 %v145
    %444 = vmatprep.subr.mxu0 0.0
    %445 = vmatpush1.msra.mxu0 %v146
    %446 = vmatprep.subr.mxu0 0.0
    %447 = vmatpush1.msra.mxu0 %v147
    %448 = vmatprep.subr.mxu0 0.0
    %449 = vmatpush1.msra.mxu0 %v148
    %450 = vmatprep.subr.mxu0 0.0
    %451 = vmatpush1.msra.mxu0 0.0
    %452 = vmatprep.subr.mxu0 0.0
    %453 = vmatpush1.msra.mxu0 0.0
    %454 = vmatprep.subr.mxu0 0.0
    %455 = vmatpush1.msra.mxu0 0.0
    %456 = vmatprep.subr.mxu0 0.0
    %457 = vmatpush1.msra.mxu0 0.0
    %458 = vmatprep.subr.mxu0 0.0
    %459 = vmatpush1.msra.mxu0 0.0
    %460 = vmatprep.subr.mxu0 0.0
    %461 = vmatpush1.msra.mxu0 0.0
    %462 = vmatprep.subr.mxu0 0.0
    %463 = vmatpush1.msra.mxu0 0.0
    %464 = vmatprep.subr.mxu0 0.0
    %465 = vmatpush1.msra.mxu0 0.0
    %466 = vmatprep.subr.mxu0 0.0
    %467 = vmatpush1.msra.mxu0 0.0
    %468 = vmatprep.subr.mxu0 0.0
    %469 = vmatpush1.msra.mxu0 0.0
    %470 = vmatprep.subr.mxu0 0.0
    %471 = vmatpush1.msra.mxu0 0.0
    %472 = vmatprep.subr.mxu0 0.0
    %473 = vmatpush1.msra.mxu0 0.0
    %474 = vmatprep.subr.mxu0 0.0
    %475 = vmatpush1.msra.mxu0 0.0
    %476 = vmatprep.subr.mxu0 0.0
    %477 = vmatpush1.msra.mxu0 0.0
    %478 = vmatprep.subr.mxu0 0.0
    %479 = vmatpush1.msra.mxu0 0.0
    %480 = vmatprep.subr.mxu0 0.0
    %481 = vmatpush1.msra.mxu0 0.0
    %482 = vmatprep.subr.mxu0 0.0
    %483 = vmatpush1.msra.mxu0 0.0
    %484 = vmatprep.subr.mxu0 0.0
    %485 = vmatpush1.msra.mxu0 0.0
    %486 = vmatprep.subr.mxu0 0.0
    %487 = vmatpush1.msra.mxu0 0.0
    %488 = vmatprep.subr.mxu0 0.0
    %489 = vmatpush1.msra.mxu0 0.0
    %490 = vmatprep.subr.mxu0 0.0
    %491 = vmatpush1.msra.mxu0 0.0
    %492 = vmatprep.subr.mxu0 0.0
    %493 = vmatpush1.msra.mxu0 0.0
    %494 = vmatprep.subr.mxu0 0.0
    %495 = vmatpush1.msra.mxu0 0.0
    %496 = vmatprep.subr.mxu0 0.0
    %497 = vmatpush1.msra.mxu0 0.0
    %498 = vmatprep.subr.mxu0 0.0
    %499 = vmatpush1.msra.mxu0 0.0
    %500 = vmatprep.subr.mxu0 0.0
    %501 = vmatpush1.msra.mxu0 0.0
    %502 = vmatprep.subr.mxu0 0.0
    %503 = vmatpush1.msra.mxu0 0.0
    %504 = vmatprep.subr.mxu0 0.0
    %505 = vmatpush1.msra.mxu0 0.0
    %506 = vmatprep.mubr.f32.mxu0 0.0
    %507 = vmatmul.mubr.f32.gmra.mrb[0].mxu0 %v440
    %v508 = vpop.f32.mrb[0].mxu0
    %v509 = vadd.f32 0.0, %v508
    %v510 = vpop.f32.mrb[0].mxu0
    %511 = vdwg.mxu0
    %v513 = vrot.slane %v509, 6
    %v514 = vrot.slane %v509, 7
    %v517 = vadd.f32 %v137, %v513
    %v518 = vadd.f32 %v142, %v514
    %v519 = vxor.u32 %v517, 2147483648
    %v520 = vxor.u32 %v518, 2147483648
    %v521 = vmul.f32 %v519, 1.442695
    %v522 = vpow.pop %v521
    %v523 = vmul.f32 %v520, 1.442695
    %v524 = vpow.pop %v523
    %v525 = vadd.f32 %v522, 1.0
    %v526 = vadd.f32 %v524, 1.0
    %v527 = vrcp.pop %v525
    %v528 = vmul.f32 1.0, %v527
    %v529 = vrcp.pop %v526
    %v530 = vmul.f32 1.0, %v529
    %v531 = vtanh.pop %v517
    %v532 = vtanh.pop %v518
    %v535 = vrot.slane %v411, 7
    %v536 = vrot.slane %v412, 7
    %v539 = vmul.f32 %v528, %v535
    %v540 = vmul.f32 %v530, %v536
    %543 = vrot.lane.b32.xlu0 %v531, 64
    %v544 = vpop.permute.xlu0 %543
    %545 = vrot.lane.b32.xlu0 %v532, 64
    %v546 = vpop.permute.xlu0 %545
    %v549 = vmul.f32 %v528, %v544
    %v550 = vmul.f32 %v530, %v546
    %553 = vrot.lane.b32.xlu0 %v549, 32
    %v554 = vpop.permute.xlu0 %553
    %555 = vrot.lane.b32.xlu0 %v550, 32
    %v556 = vpop.permute.xlu0 %555
    %v559 = vadd.f32 %v539, %v554
    %v560 = vadd.f32 %v540, %v556
    %v561 = vtanh.pop %v559
    %v562 = vtanh.pop %v560
    %565 = vrot.lane.b32.xlu0 %v561, 64
    %v566 = vpop.permute.xlu0 %565
    %567 = vrot.lane.b32.xlu0 %v562, 64
    %v568 = vpop.permute.xlu0 %567
    %v571 = vmul.f32 %v528, %v566
    %v572 = vmul.f32 %v530, %v568
    %575 = vrot.lane.b32.xlu0 %v571, 32
    %v576 = vpop.permute.xlu0 %575
    %577 = vrot.lane.b32.xlu0 %v572, 32
    %v578 = vpop.permute.xlu0 %577
    %vm581 = vcmask 256002
    %582 = vst.msk [vmem:[#allocation2] sm:$0x4] %vm581, %v576
    %583 = vst.msk [vmem:[#allocation2 + $0x8] sm:$0x4] %vm581, %v578
    %v584 = vrot.slane %v571, 2
    %v585 = vrot.slane %v572, 1
    %v586 = vsel %vm289, %v585, %v584
    %587 = vrot.lane.b32.xlu0 %v586, 32
    %v588 = vpop.permute.xlu0 %587
    %v589 = vsel %vm149, %v588, 0
    %591 = vmatprep.subr.mxu0 0.0
    %592 = vmatpush1.msra.mxu0 %v145
    %593 = vmatprep.subr.mxu0 0.0
    %594 = vmatpush1.msra.mxu0 %v146
    %595 = vmatprep.subr.mxu0 0.0
    %596 = vmatpush1.msra.mxu0 %v147
    %597 = vmatprep.subr.mxu0 0.0
    %598 = vmatpush1.msra.mxu0 %v148
    %599 = vmatprep.subr.mxu0 0.0
    %600 = vmatpush1.msra.mxu0 0.0
    %601 = vmatprep.subr.mxu0 0.0
    %602 = vmatpush1.msra.mxu0 0.0
    %603 = vmatprep.subr.mxu0 0.0
    %604 = vmatpush1.msra.mxu0 0.0
    %605 = vmatprep.subr.mxu0 0.0
    %606 = vmatpush1.msra.mxu0 0.0
    %607 = vmatprep.subr.mxu0 0.0
    %608 = vmatpush1.msra.mxu0 0.0
    %609 = vmatprep.subr.mxu0 0.0
    %610 = vmatpush1.msra.mxu0 0.0
    %611 = vmatprep.subr.mxu0 0.0
    %612 = vmatpush1.msra.mxu0 0.0
    %613 = vmatprep.subr.mxu0 0.0
    %614 = vmatpush1.msra.mxu0 0.0
    %615 = vmatprep.subr.mxu0 0.0
    %616 = vmatpush1.msra.mxu0 0.0
    %617 = vmatprep.subr.mxu0 0.0
    %618 = vmatpush1.msra.mxu0 0.0
    %619 = vmatprep.subr.mxu0 0.0
    %620 = vmatpush1.msra.mxu0 0.0
    %621 = vmatprep.subr.mxu0 0.0
    %622 = vmatpush1.msra.mxu0 0.0
    %623 = vmatprep.subr.mxu0 0.0
    %624 = vmatpush1.msra.mxu0 0.0
    %625 = vmatprep.subr.mxu0 0.0
    %626 = vmatpush1.msra.mxu0 0.0
    %627 = vmatprep.subr.mxu0 0.0
    %628 = vmatpush1.msra.mxu0 0.0
    %629 = vmatprep.subr.mxu0 0.0
    %630 = vmatpush1.msra.mxu0 0.0
    %631 = vmatprep.subr.mxu0 0.0
    %632 = vmatpush1.msra.mxu0 0.0
    %633 = vmatprep.subr.mxu0 0.0
    %634 = vmatpush1.msra.mxu0 0.0
    %635 = vmatprep.subr.mxu0 0.0
    %636 = vmatpush1.msra.mxu0 0.0
    %637 = vmatprep.subr.mxu0 0.0
    %638 = vmatpush1.msra.mxu0 0.0
    %639 = vmatprep.subr.mxu0 0.0
    %640 = vmatpush1.msra.mxu0 0.0
    %641 = vmatprep.subr.mxu0 0.0
    %642 = vmatpush1.msra.mxu0 0.0
    %643 = vmatprep.subr.mxu0 0.0
    %644 = vmatpush1.msra.mxu0 0.0
    %645 = vmatprep.subr.mxu0 0.0
    %646 = vmatpush1.msra.mxu0 0.0
    %647 = vmatprep.subr.mxu0 0.0
    %648 = vmatpush1.msra.mxu0 0.0
    %649 = vmatprep.subr.mxu0 0.0
    %650 = vmatpush1.msra.mxu0 0.0
    %651 = vmatprep.subr.mxu0 0.0
    %652 = vmatpush1.msra.mxu0 0.0
    %653 = vmatprep.subr.mxu0 0.0
    %654 = vmatpush1.msra.mxu0 0.0
    %655 = vmatprep.mubr.f32.mxu0 0.0
    %656 = vmatmul.mubr.f32.gmra.mrb[0].mxu0 %v589
    %v657 = vpop.f32.mrb[0].mxu0
    %v658 = vadd.f32 0.0, %v657
    %v659 = vpop.f32.mrb[0].mxu0
    %660 = vdwg.mxu0
    %v662 = vrot.slane %v658, 5
    %v663 = vrot.slane %v658, 6
    %v666 = vadd.f32 %v137, %v662
    %v667 = vadd.f32 %v142, %v663
    %v668 = vxor.u32 %v666, 2147483648
    %v669 = vxor.u32 %v667, 2147483648
    %v670 = vmul.f32 %v668, 1.442695
    %v671 = vpow.pop %v670
    %v672 = vmul.f32 %v669, 1.442695
    %v673 = vpow.pop %v672
    %v674 = vadd.f32 %v671, 1.0
    %v675 = vadd.f32 %v673, 1.0
    %v676 = vrcp.pop %v674
    %v677 = vmul.f32 1.0, %v676
    %v678 = vrcp.pop %v675
    %v679 = vmul.f32 1.0, %v678
    %v680 = vtanh.pop %v666
    %v681 = vtanh.pop %v667
    %v684 = vrot.slane %v559, 7
    %v685 = vrot.slane %v560, 7
    %v688 = vmul.f32 %v677, %v684
    %v689 = vmul.f32 %v679, %v685
    %692 = vrot.lane.b32.xlu0 %v680, 64
    %v693 = vpop.permute.xlu0 %692
    %694 = vrot.lane.b32.xlu0 %v681, 64
    %v695 = vpop.permute.xlu0 %694
    %v698 = vmul.f32 %v677, %v693
    %v699 = vmul.f32 %v679, %v695
    %702 = vrot.lane.b32.xlu0 %v698, 32
    %v703 = vpop.permute.xlu0 %702
    %704 = vrot.lane.b32.xlu0 %v699, 32
    %v705 = vpop.permute.xlu0 %704
    %v708 = vadd.f32 %v688, %v703
    %v709 = vadd.f32 %v689, %v705
    %v710 = vtanh.pop %v708
    %v711 = vtanh.pop %v709
    %714 = vrot.lane.b32.xlu0 %v710, 64
    %v715 = vpop.permute.xlu0 %714
    %716 = vrot.lane.b32.xlu0 %v711, 64
    %v717 = vpop.permute.xlu0 %716
    %v720 = vmul.f32 %v677, %v715
    %v721 = vmul.f32 %v679, %v717
    %724 = vrot.lane.b32.xlu0 %v720, 32
    %v725 = vpop.permute.xlu0 %724
    %726 = vrot.lane.b32.xlu0 %v721, 32
    %v727 = vpop.permute.xlu0 %726
    %vm730 = vcmask 257027
    %731 = vst.msk [vmem:[#allocation2] sm:$0x8] %vm730, %v725
    %732 = vst.msk [vmem:[#allocation2 + $0x8] sm:$0x8] %vm730, %v727
    %v733 = vrot.slane %v720, 3
    %v734 = vrot.slane %v721, 2
    %v735 = vsel %vm289, %v734, %v733
    %736 = vrot.lane.b32.xlu0 %v735, 32
    %v737 = vpop.permute.xlu0 %736
    %v738 = vsel %vm149, %v737, 0
    %740 = vmatprep.subr.mxu0 0.0
    %741 = vmatpush1.msra.mxu0 %v145
    %742 = vmatprep.subr.mxu0 0.0
    %743 = vmatpush1.msra.mxu0 %v146
    %744 = vmatprep.subr.mxu0 0.0
    %745 = vmatpush1.msra.mxu0 %v147
    %746 = vmatprep.subr.mxu0 0.0
    %747 = vmatpush1.msra.mxu0 %v148
    %748 = vmatprep.subr.mxu0 0.0
    %749 = vmatpush1.msra.mxu0 0.0
    %750 = vmatprep.subr.mxu0 0.0
    %751 = vmatpush1.msra.mxu0 0.0
    %752 = vmatprep.subr.mxu0 0.0
    %753 = vmatpush1.msra.mxu0 0.0
    %754 = vmatprep.subr.mxu0 0.0
    %755 = vmatpush1.msra.mxu0 0.0
    %756 = vmatprep.subr.mxu0 0.0
    %757 = vmatpush1.msra.mxu0 0.0
    %758 = vmatprep.subr.mxu0 0.0
    %759 = vmatpush1.msra.mxu0 0.0
    %760 = vmatprep.subr.mxu0 0.0
    %761 = vmatpush1.msra.mxu0 0.0
    %762 = vmatprep.subr.mxu0 0.0
    %763 = vmatpush1.msra.mxu0 0.0
    %764 = vmatprep.subr.mxu0 0.0
    %765 = vmatpush1.msra.mxu0 0.0
    %766 = vmatprep.subr.mxu0 0.0
    %767 = vmatpush1.msra.mxu0 0.0
    %768 = vmatprep.subr.mxu0 0.0
    %769 = vmatpush1.msra.mxu0 0.0
    %770 = vmatprep.subr.mxu0 0.0
    %771 = vmatpush1.msra.mxu0 0.0
    %772 = vmatprep.subr.mxu0 0.0
    %773 = vmatpush1.msra.mxu0 0.0
    %774 = vmatprep.subr.mxu0 0.0
    %775 = vmatpush1.msra.mxu0 0.0
    %776 = vmatprep.subr.mxu0 0.0
    %777 = vmatpush1.msra.mxu0 0.0
    %778 = vmatprep.subr.mxu0 0.0
    %779 = vmatpush1.msra.mxu0 0.0
    %780 = vmatprep.subr.mxu0 0.0
    %781 = vmatpush1.msra.mxu0 0.0
    %782 = vmatprep.subr.mxu0 0.0
    %783 = vmatpush1.msra.mxu0 0.0
    %784 = vmatprep.subr.mxu0 0.0
    %785 = vmatpush1.msra.mxu0 0.0
    %786 = vmatprep.subr.mxu0 0.0
    %787 = vmatpush1.msra.mxu0 0.0
    %788 = vmatprep.subr.mxu0 0.0
    %789 = vmatpush1.msra.mxu0 0.0
    %790 = vmatprep.subr.mxu0 0.0
    %791 = vmatpush1.msra.mxu0 0.0
    %792 = vmatprep.subr.mxu0 0.0
    %793 = vmatpush1.msra.mxu0 0.0
    %794 = vmatprep.subr.mxu0 0.0
    %795 = vmatpush1.msra.mxu0 0.0
    %796 = vmatprep.subr.mxu0 0.0
    %797 = vmatpush1.msra.mxu0 0.0
    %798 = vmatprep.subr.mxu0 0.0
    %799 = vmatpush1.msra.mxu0 0.0
    %800 = vmatprep.subr.mxu0 0.0
    %801 = vmatpush1.msra.mxu0 0.0
    %802 = vmatprep.subr.mxu0 0.0
    %803 = vmatpush1.msra.mxu0 0.0
    %804 = vmatprep.mubr.f32.mxu0 0.0
    %805 = vmatmul.mubr.f32.gmra.mrb[0].mxu0 %v738
    %v806 = vpop.f32.mrb[0].mxu0
    %v807 = vadd.f32 0.0, %v806
    %v808 = vpop.f32.mrb[0].mxu0
    %809 = vdwg.mxu0
    %v811 = vrot.slane %v807, 4
    %v812 = vrot.slane %v807, 5
    %v815 = vadd.f32 %v137, %v811
    %v816 = vadd.f32 %v142, %v812
    %v817 = vxor.u32 %v815, 2147483648
    %v818 = vxor.u32 %v816, 2147483648
    %v819 = vmul.f32 %v817, 1.442695
    %v820 = vpow.pop %v819
    %v821 = vmul.f32 %v818, 1.442695
    %v822 = vpow.pop %v821
    %v823 = vadd.f32 %v820, 1.0
    %v824 = vadd.f32 %v822, 1.0
    %v825 = vrcp.pop %v823
    %v826 = vmul.f32 1.0, %v825
    %v827 = vrcp.pop %v824
    %v828 = vmul.f32 1.0, %v827
    %v829 = vtanh.pop %v815
    %v830 = vtanh.pop %v816
    %v833 = vrot.slane %v708, 7
    %v834 = vrot.slane %v709, 7
    %v837 = vmul.f32 %v826, %v833
    %v838 = vmul.f32 %v828, %v834
    %841 = vrot.lane.b32.xlu0 %v829, 64
    %v842 = vpop.permute.xlu0 %841
    %843 = vrot.lane.b32.xlu0 %v830, 64
    %v844 = vpop.permute.xlu0 %843
    %v847 = vmul.f32 %v826, %v842
    %v848 = vmul.f32 %v828, %v844
    %851 = vrot.lane.b32.xlu0 %v847, 32
    %v852 = vpop.permute.xlu0 %851
    %853 = vrot.lane.b32.xlu0 %v848, 32
    %v854 = vpop.permute.xlu0 %853
    %v857 = vadd.f32 %v837, %v852
    %v858 = vadd.f32 %v838, %v854
    %v859 = vtanh.pop %v857
    %v860 = vtanh.pop %v858
    %863 = vrot.lane.b32.xlu0 %v859, 64
    %v864 = vpop.permute.xlu0 %863
    %865 = vrot.lane.b32.xlu0 %v860, 64
    %v866 = vpop.permute.xlu0 %865
    %v869 = vmul.f32 %v826, %v864
    %v870 = vmul.f32 %v828, %v866
    %873 = vrot.lane.b32.xlu0 %v869, 32
    %v874 = vpop.permute.xlu0 %873
    %875 = vrot.lane.b32.xlu0 %v870, 32
    %v876 = vpop.permute.xlu0 %875
    %vm879 = vcmask 258052
    %880 = vst.msk [vmem:[#allocation2] sm:$0x10] %vm879, %v874
    %881 = vst.msk [vmem:[#allocation2 + $0x8] sm:$0x10] %vm879, %v876
    %v882 = vrot.slane %v869, 4
    %v883 = vrot.slane %v870, 3
    %v884 = vsel %vm289, %v883, %v882
    %885 = vrot.lane.b32.xlu0 %v884, 32
    %v886 = vpop.permute.xlu0 %885
    %v887 = vsel %vm149, %v886, 0
    %889 = vmatprep.subr.mxu0 0.0
    %890 = vmatpush1.msra.mxu0 %v145
    %891 = vmatprep.subr.mxu0 0.0
    %892 = vmatpush1.msra.mxu0 %v146
    %893 = vmatprep.subr.mxu0 0.0
    %894 = vmatpush1.msra.mxu0 %v147
    %895 = vmatprep.subr.mxu0 0.0
    %896 = vmatpush1.msra.mxu0 %v148
    %897 = vmatprep.subr.mxu0 0.0
    %898 = vmatpush1.msra.mxu0 0.0
    %899 = vmatprep.subr.mxu0 0.0
    %900 = vmatpush1.msra.mxu0 0.0
    %901 = vmatprep.subr.mxu0 0.0
    %902 = vmatpush1.msra.mxu0 0.0
    %903 = vmatprep.subr.mxu0 0.0
    %904 = vmatpush1.msra.mxu0 0.0
    %905 = vmatprep.subr.mxu0 0.0
    %906 = vmatpush1.msra.mxu0 0.0
    %907 = vmatprep.subr.mxu0 0.0
    %908 = vmatpush1.msra.mxu0 0.0
    %909 = vmatprep.subr.mxu0 0.0
    %910 = vmatpush1.msra.mxu0 0.0
    %911 = vmatprep.subr.mxu0 0.0
    %912 = vmatpush1.msra.mxu0 0.0
    %913 = vmatprep.subr.mxu0 0.0
    %914 = vmatpush1.msra.mxu0 0.0
    %915 = vmatprep.subr.mxu0 0.0
    %916 = vmatpush1.msra.mxu0 0.0
    %917 = vmatprep.subr.mxu0 0.0
    %918 = vmatpush1.msra.mxu0 0.0
    %919 = vmatprep.subr.mxu0 0.0
    %920 = vmatpush1.msra.mxu0 0.0
    %921 = vmatprep.subr.mxu0 0.0
    %922 = vmatpush1.msra.mxu0 0.0
    %923 = vmatprep.subr.mxu0 0.0
    %924 = vmatpush1.msra.mxu0 0.0
    %925 = vmatprep.subr.mxu0 0.0
    %926 = vmatpush1.msra.mxu0 0.0
    %927 = vmatprep.subr.mxu0 0.0
    %928 = vmatpush1.msra.mxu0 0.0
    %929 = vmatprep.subr.mxu0 0.0
    %930 = vmatpush1.msra.mxu0 0.0
    %931 = vmatprep.subr.mxu0 0.0
    %932 = vmatpush1.msra.mxu0 0.0
    %933 = vmatprep.subr.mxu0 0.0
    %934 = vmatpush1.msra.mxu0 0.0
    %935 = vmatprep.subr.mxu0 0.0
    %936 = vmatpush1.msra.mxu0 0.0
    %937 = vmatprep.subr.mxu0 0.0
    %938 = vmatpush1.msra.mxu0 0.0
    %939 = vmatprep.subr.mxu0 0.0
    %940 = vmatpush1.msra.mxu0 0.0
    %941 = vmatprep.subr.mxu0 0.0
    %942 = vmatpush1.msra.mxu0 0.0
    %943 = vmatprep.subr.mxu0 0.0
    %944 = vmatpush1.msra.mxu0 0.0
    %945 = vmatprep.subr.mxu0 0.0
    %946 = vmatpush1.msra.mxu0 0.0
    %947 = vmatprep.subr.mxu0 0.0
    %948 = vmatpush1.msra.mxu0 0.0
    %949 = vmatprep.subr.mxu0 0.0
    %950 = vmatpush1.msra.mxu0 0.0
    %951 = vmatprep.subr.mxu0 0.0
    %952 = vmatpush1.msra.mxu0 0.0
    %953 = vmatprep.mubr.f32.mxu0 0.0
    %954 = vmatmul.mubr.f32.gmra.mrb[0].mxu0 %v887
    %v955 = vpop.f32.mrb[0].mxu0
    %v956 = vadd.f32 0.0, %v955
    %v957 = vpop.f32.mrb[0].mxu0
    %958 = vdwg.mxu0
    %v960 = vrot.slane %v956, 3
    %v961 = vrot.slane %v956, 4
    %v964 = vadd.f32 %v137, %v960
    %v965 = vadd.f32 %v142, %v961
    %v966 = vxor.u32 %v964, 2147483648
    %v967 = vxor.u32 %v965, 2147483648
    %v968 = vmul.f32 %v966, 1.442695
    %v969 = vpow.pop %v968
    %v970 = vmul.f32 %v967, 1.442695
    %v971 = vpow.pop %v970
    %v972 = vadd.f32 %v969, 1.0
    %v973 = vadd.f32 %v971, 1.0
    %v974 = vrcp.pop %v972
    %v975 = vmul.f32 1.0, %v974
    %v976 = vrcp.pop %v973
    %v977 = vmul.f32 1.0, %v976
    %v978 = vtanh.pop %v964
    %v979 = vtanh.pop %v965
    %v982 = vrot.slane %v857, 7
    %v983 = vrot.slane %v858, 7
    %v986 = vmul.f32 %v975, %v982
    %v987 = vmul.f32 %v977, %v983
    %990 = vrot.lane.b32.xlu0 %v978, 64
    %v991 = vpop.permute.xlu0 %990
    %992 = vrot.lane.b32.xlu0 %v979, 64
    %v993 = vpop.permute.xlu0 %992
    %v996 = vmul.f32 %v975, %v991
    %v997 = vmul.f32 %v977, %v993
    %1000 = vrot.lane.b32.xlu0 %v996, 32
    %v1001 = vpop.permute.xlu0 %1000
    %1002 = vrot.lane.b32.xlu0 %v997, 32
    %v1003 = vpop.permute.xlu0 %1002
    %v1006 = vadd.f32 %v986, %v1001
    %v1007 = vadd.f32 %v987, %v1003
    %v1008 = vtanh.pop %v1006
    %v1009 = vtanh.pop %v1007
    %1012 = vrot.lane.b32.xlu0 %v1008, 64
    %v1013 = vpop.permute.xlu0 %1012
    %1014 = vrot.lane.b32.xlu0 %v1009, 64
    %v1015 = vpop.permute.xlu0 %1014
    %v1018 = vmul.f32 %v975, %v1013
    %v1019 = vmul.f32 %v977, %v1015
    %1022 = vrot.lane.b32.xlu0 %v1018, 32
    %v1023 = vpop.permute.xlu0 %1022
    %1024 = vrot.lane.b32.xlu0 %v1019, 32
    %v1025 = vpop.permute.xlu0 %1024
    %vm1028 = vcmask 259077
    %1029 = vst.msk [vmem:[#allocation2] sm:$0x20] %vm1028, %v1023
    %1030 = vst.msk [vmem:[#allocation2 + $0x8] sm:$0x20] %vm1028, %v1025
    %v1031 = vrot.slane %v1018, 5
    %v1032 = vrot.slane %v1019, 4
    %v1033 = vsel %vm289, %v1032, %v1031
    %1034 = vrot.lane.b32.xlu0 %v1033, 32
    %v1035 = vpop.permute.xlu0 %1034
    %v1036 = vsel %vm149, %v1035, 0
    %1038 = vmatprep.subr.mxu0 0.0
    %1039 = vmatpush1.msra.mxu0 %v145
    %1040 = vmatprep.subr.mxu0 0.0
    %1041 = vmatpush1.msra.mxu0 %v146
    %1042 = vmatprep.subr.mxu0 0.0
    %1043 = vmatpush1.msra.mxu0 %v147
    %1044 = vmatprep.subr.mxu0 0.0
    %1045 = vmatpush1.msra.mxu0 %v148
    %1046 = vmatprep.subr.mxu0 0.0
    %1047 = vmatpush1.msra.mxu0 0.0
    %1048 = vmatprep.subr.mxu0 0.0
    %1049 = vmatpush1.msra.mxu0 0.0
    %1050 = vmatprep.subr.mxu0 0.0
    %1051 = vmatpush1.msra.mxu0 0.0
    %1052 = vmatprep.subr.mxu0 0.0
    %1053 = vmatpush1.msra.mxu0 0.0
    %1054 = vmatprep.subr.mxu0 0.0
    %1055 = vmatpush1.msra.mxu0 0.0
    %1056 = vmatprep.subr.mxu0 0.0
    %1057 = vmatpush1.msra.mxu0 0.0
    %1058 = vmatprep.subr.mxu0 0.0
    %1059 = vmatpush1.msra.mxu0 0.0
    %1060 = vmatprep.subr.mxu0 0.0
    %1061 = vmatpush1.msra.mxu0 0.0
    %1062 = vmatprep.subr.mxu0 0.0
    %1063 = vmatpush1.msra.mxu0 0.0
    %1064 = vmatprep.subr.mxu0 0.0
    %1065 = vmatpush1.msra.mxu0 0.0
    %1066 = vmatprep.subr.mxu0 0.0
    %1067 = vmatpush1.msra.mxu0 0.0
    %1068 = vmatprep.subr.mxu0 0.0
    %1069 = vmatpush1.msra.mxu0 0.0
    %1070 = vmatprep.subr.mxu0 0.0
    %1071 = vmatpush1.msra.mxu0 0.0
    %1072 = vmatprep.subr.mxu0 0.0
    %1073 = vmatpush1.msra.mxu0 0.0
    %1074 = vmatprep.subr.mxu0 0.0
    %1075 = vmatpush1.msra.mxu0 0.0
    %1076 = vmatprep.subr.mxu0 0.0
    %1077 = vmatpush1.msra.mxu0 0.0
    %1078 = vmatprep.subr.mxu0 0.0
    %1079 = vmatpush1.msra.mxu0 0.0
    %1080 = vmatprep.subr.mxu0 0.0
    %1081 = vmatpush1.msra.mxu0 0.0
    %1082 = vmatprep.subr.mxu0 0.0
    %1083 = vmatpush1.msra.mxu0 0.0
    %1084 = vmatprep.subr.mxu0 0.0
    %1085 = vmatpush1.msra.mxu0 0.0
    %1086 = vmatprep.subr.mxu0 0.0
    %1087 = vmatpush1.msra.mxu0 0.0
    %1088 = vmatprep.subr.mxu0 0.0
    %1089 = vmatpush1.msra.mxu0 0.0
    %1090 = vmatprep.subr.mxu0 0.0
    %1091 = vmatpush1.msra.mxu0 0.0
    %1092 = vmatprep.subr.mxu0 0.0
    %1093 = vmatpush1.msra.mxu0 0.0
    %1094 = vmatprep.subr.mxu0 0.0
    %1095 = vmatpush1.msra.mxu0 0.0
    %1096 = vmatprep.subr.mxu0 0.0
    %1097 = vmatpush1.msra.mxu0 0.0
    %1098 = vmatprep.subr.mxu0 0.0
    %1099 = vmatpush1.msra.mxu0 0.0
    %1100 = vmatprep.subr.mxu0 0.0
    %1101 = vmatpush1.msra.mxu0 0.0
    %1102 = vmatprep.mubr.f32.mxu0 0.0
    %1103 = vmatmul.mubr.f32.gmra.mrb[0].mxu0 %v1036
    %v1104 = vpop.f32.mrb[0].mxu0
    %v1105 = vadd.f32 0.0, %v1104
    %v1106 = vpop.f32.mrb[0].mxu0
    %1107 = vdwg.mxu0
    %v1109 = vrot.slane %v1105, 2
    %v1110 = vrot.slane %v1105, 3
    %v1113 = vadd.f32 %v137, %v1109
    %v1114 = vadd.f32 %v142, %v1110
    %v1115 = vxor.u32 %v1113, 2147483648
    %v1116 = vxor.u32 %v1114, 2147483648
    %v1117 = vmul.f32 %v1115, 1.442695
    %v1118 = vpow.pop %v1117
    %v1119 = vmul.f32 %v1116, 1.442695
    %v1120 = vpow.pop %v1119
    %v1121 = vadd.f32 %v1118, 1.0
    %v1122 = vadd.f32 %v1120, 1.0
    %v1123 = vrcp.pop %v1121
    %v1124 = vmul.f32 1.0, %v1123
    %v1125 = vrcp.pop %v1122
    %v1126 = vmul.f32 1.0, %v1125
    %v1127 = vtanh.pop %v1113
    %v1128 = vtanh.pop %v1114
    %v1131 = vrot.slane %v1006, 7
    %v1132 = vrot.slane %v1007, 7
    %v1135 = vmul.f32 %v1124, %v1131
    %v1136 = vmul.f32 %v1126, %v1132
    %1139 = vrot.lane.b32.xlu0 %v1127, 64
    %v1140 = vpop.permute.xlu0 %1139
    %1141 = vrot.lane.b32.xlu0 %v1128, 64
    %v1142 = vpop.permute.xlu0 %1141
    %v1145 = vmul.f32 %v1124, %v1140
    %v1146 = vmul.f32 %v1126, %v1142
    %1149 = vrot.lane.b32.xlu0 %v1145, 32
    %v1150 = vpop.permute.xlu0 %1149
    %1151 = vrot.lane.b32.xlu0 %v1146, 32
    %v1152 = vpop.permute.xlu0 %1151
    %v1155 = vadd.f32 %v1135, %v1150
    %v1156 = vadd.f32 %v1136, %v1152
    %v1157 = vtanh.pop %v1155
    %v1158 = vtanh.pop %v1156
    %1161 = vrot.lane.b32.xlu0 %v1157, 64
    %v1162 = vpop.permute.xlu0 %1161
    %1163 = vrot.lane.b32.xlu0 %v1158, 64
    %v1164 = vpop.permute.xlu0 %1163
    %v1167 = vmul.f32 %v1124, %v1162
    %v1168 = vmul.f32 %v1126, %v1164
    %1171 = vrot.lane.b32.xlu0 %v1167, 32
    %v1172 = vpop.permute.xlu0 %1171
    %1173 = vrot.lane.b32.xlu0 %v1168, 32
    %v1174 = vpop.permute.xlu0 %1173
    %vm1177 = vcmask 260102
    %1178 = vst.msk [vmem:[#allocation2] sm:$0x40] %vm1177, %v1172
    %1179 = vst.msk [vmem:[#allocation2 + $0x8] sm:$0x40] %vm1177, %v1174
    %v1180 = vrot.slane %v1167, 6
    %v1181 = vrot.slane %v1168, 5
    %v1182 = vsel %vm289, %v1181, %v1180
    %1183 = vrot.lane.b32.xlu0 %v1182, 32
    %v1184 = vpop.permute.xlu0 %1183
    %v1185 = vsel %vm149, %v1184, 0
    %1187 = vmatprep.subr.mxu0 0.0
    %1188 = vmatpush1.msra.mxu0 %v145
    %1189 = vmatprep.subr.mxu0 0.0
    %1190 = vmatpush1.msra.mxu0 %v146
    %1191 = vmatprep.subr.mxu0 0.0
    %1192 = vmatpush1.msra.mxu0 %v147
    %1193 = vmatprep.subr.mxu0 0.0
    %1194 = vmatpush1.msra.mxu0 %v148
    %1195 = vmatprep.subr.mxu0 0.0
    %1196 = vmatpush1.msra.mxu0 0.0
    %1197 = vmatprep.subr.mxu0 0.0
    %1198 = vmatpush1.msra.mxu0 0.0
    %1199 = vmatprep.subr.mxu0 0.0
    %1200 = vmatpush1.msra.mxu0 0.0
    %1201 = vmatprep.subr.mxu0 0.0
    %1202 = vmatpush1.msra.mxu0 0.0
    %1203 = vmatprep.subr.mxu0 0.0
    %1204 = vmatpush1.msra.mxu0 0.0
    %1205 = vmatprep.subr.mxu0 0.0
    %1206 = vmatpush1.msra.mxu0 0.0
    %1207 = vmatprep.subr.mxu0 0.0
    %1208 = vmatpush1.msra.mxu0 0.0
    %1209 = vmatprep.subr.mxu0 0.0
    %1210 = vmatpush1.msra.mxu0 0.0
    %1211 = vmatprep.subr.mxu0 0.0
    %1212 = vmatpush1.msra.mxu0 0.0
    %1213 = vmatprep.subr.mxu0 0.0
    %1214 = vmatpush1.msra.mxu0 0.0
    %1215 = vmatprep.subr.mxu0 0.0
    %1216 = vmatpush1.msra.mxu0 0.0
    %1217 = vmatprep.subr.mxu0 0.0
    %1218 = vmatpush1.msra.mxu0 0.0
    %1219 = vmatprep.subr.mxu0 0.0
    %1220 = vmatpush1.msra.mxu0 0.0
    %1221 = vmatprep.subr.mxu0 0.0
    %1222 = vmatpush1.msra.mxu0 0.0
    %1223 = vmatprep.subr.mxu0 0.0
    %1224 = vmatpush1.msra.mxu0 0.0
    %1225 = vmatprep.subr.mxu0 0.0
    %1226 = vmatpush1.msra.mxu0 0.0
    %1227 = vmatprep.subr.mxu0 0.0
    %1228 = vmatpush1.msra.mxu0 0.0
    %1229 = vmatprep.subr.mxu0 0.0
    %1230 = vmatpush1.msra.mxu0 0.0
    %1231 = vmatprep.subr.mxu0 0.0
    %1232 = vmatpush1.msra.mxu0 0.0
    %1233 = vmatprep.subr.mxu0 0.0
    %1234 = vmatpush1.msra.mxu0 0.0
    %1235 = vmatprep.subr.mxu0 0.0
    %1236 = vmatpush1.msra.mxu0 0.0
    %1237 = vmatprep.subr.mxu0 0.0
    %1238 = vmatpush1.msra.mxu0 0.0
    %1239 = vmatprep.subr.mxu0 0.0
    %1240 = vmatpush1.msra.mxu0 0.0
    %1241 = vmatprep.subr.mxu0 0.0
    %1242 = vmatpush1.msra.mxu0 0.0
    %1243 = vmatprep.subr.mxu0 0.0
    %1244 = vmatpush1.msra.mxu0 0.0
    %1245 = vmatprep.subr.mxu0 0.0
    %1246 = vmatpush1.msra.mxu0 0.0
    %1247 = vmatprep.subr.mxu0 0.0
    %1248 = vmatpush1.msra.mxu0 0.0
    %1249 = vmatprep.subr.mxu0 0.0
    %1250 = vmatpush1.msra.mxu0 0.0
    %1251 = vmatprep.mubr.f32.mxu0 0.0
    %1252 = vmatmul.mubr.f32.gmra.mrb[0].mxu0 %v1185
    %v1253 = vpop.f32.mrb[0].mxu0
    %v1254 = vadd.f32 0.0, %v1253
    %v1255 = vpop.f32.mrb[0].mxu0
    %1256 = vdwg.mxu0
    %v1258 = vrot.slane %v1254, 1
    %v1259 = vrot.slane %v1254, 2
    %v1262 = vadd.f32 %v137, %v1258
    %v1263 = vadd.f32 %v142, %v1259
    %v1264 = vxor.u32 %v1262, 2147483648
    %v1265 = vxor.u32 %v1263, 2147483648
    %v1266 = vmul.f32 %v1264, 1.442695
    %v1267 = vpow.pop %v1266
    %v1268 = vmul.f32 %v1265, 1.442695
    %v1269 = vpow.pop %v1268
    %v1270 = vadd.f32 %v1267, 1.0
    %v1271 = vadd.f32 %v1269, 1.0
    %v1272 = vrcp.pop %v1270
    %v1273 = vmul.f32 1.0, %v1272
    %v1274 = vrcp.pop %v1271
    %v1275 = vmul.f32 1.0, %v1274
    %v1276 = vtanh.pop %v1262
    %v1277 = vtanh.pop %v1263
    %v1280 = vrot.slane %v1155, 7
    %v1281 = vrot.slane %v1156, 7
    %v1284 = vmul.f32 %v1273, %v1280
    %v1285 = vmul.f32 %v1275, %v1281
    %1288 = vrot.lane.b32.xlu0 %v1276, 64
    %v1289 = vpop.permute.xlu0 %1288
    %1290 = vrot.lane.b32.xlu0 %v1277, 64
    %v1291 = vpop.permute.xlu0 %1290
    %v1294 = vmul.f32 %v1273, %v1289
    %v1295 = vmul.f32 %v1275, %v1291
    %1298 = vrot.lane.b32.xlu0 %v1294, 32
    %v1299 = vpop.permute.xlu0 %1298
    %1300 = vrot.lane.b32.xlu0 %v1295, 32
    %v1301 = vpop.permute.xlu0 %1300
    %v1304 = vadd.f32 %v1284, %v1299
    %v1305 = vadd.f32 %v1285, %v1301
    %v1306 = vtanh.pop %v1304
    %v1307 = vtanh.pop %v1305
    %1310 = vrot.lane.b32.xlu0 %v1306, 64
    %v1311 = vpop.permute.xlu0 %1310
    %1312 = vrot.lane.b32.xlu0 %v1307, 64
    %v1313 = vpop.permute.xlu0 %1312
    %v1316 = vmul.f32 %v1273, %v1311
    %v1317 = vmul.f32 %v1275, %v1313
    %1320 = vrot.lane.b32.xlu0 %v1316, 32
    %v1321 = vpop.permute.xlu0 %1320
    %1322 = vrot.lane.b32.xlu0 %v1317, 32
    %v1323 = vpop.permute.xlu0 %1322
    %vm1326 = vcmask 261127
    %1327 = vst.msk [vmem:[#allocation2] sm:$0x80] %vm1326, %v1321
    %1328 = vst.msk [vmem:[#allocation2 + $0x8] sm:$0x80] %vm1326, %v1323
    %v1329 = vld [vmem:[#allocation2] sm:$0xff]
    %v1330 = vld [vmem:[#allocation2 + $0x8] sm:$0xff]
    %v1331 = vld [vmem:[%s4] sm:$0xff]
    %v1332 = vld [vmem:[%s4 + $0x8] sm:$0xff]
    %v1333 = vld [vmem:[%s4 + $0x10] sm:$0xff]
    %v1334 = vld [vmem:[%s4 + $0x18] sm:$0xff]
    %v1335 = vld [vmem:[%s5] sm:$0x1]
    %v1337 = vlaneseq
    %v1338 = vshrl.u32 %v1337, 7
    %v1339 = vsub.s32 0, %v1338
    %v1340 = vrot.slane %v1335, %v1339
    %v1343 = vsel %vm149, %v1329, 0
    %v1346 = vsel %vm149, %v1330, 0
    %1348 = vmatprep.subr.mxu0 0.0
    %1349 = vmatpush1.msra.mxu0 %v1331
    %1350 = vmatprep.subr.mxu0 0.0
    %1351 = vmatpush1.msra.mxu0 %v1332
    %1352 = vmatprep.subr.mxu0 0.0
    %1353 = vmatpush1.msra.mxu0 %v1333
    %1354 = vmatprep.subr.mxu0 0.0
    %1355 = vmatpush1.msra.mxu0 %v1334
    %1356 = vmatprep.subr.mxu0 0.0
    %1357 = vmatpush1.msra.mxu0 0.0
    %1358 = vmatprep.subr.mxu0 0.0
    %1359 = vmatpush1.msra.mxu0 0.0
    %1360 = vmatprep.subr.mxu0 0.0
    %1361 = vmatpush1.msra.mxu0 0.0
    %1362 = vmatprep.subr.mxu0 0.0
    %1363 = vmatpush1.msra.mxu0 0.0
    %1364 = vmatprep.subr.mxu0 0.0
    %1365 = vmatpush1.msra.mxu0 0.0
    %1366 = vmatprep.subr.mxu0 0.0
    %1367 = vmatpush1.msra.mxu0 0.0
    %1368 = vmatprep.subr.mxu0 0.0
    %1369 = vmatpush1.msra.mxu0 0.0
    %1370 = vmatprep.subr.mxu0 0.0
    %1371 = vmatpush1.msra.mxu0 0.0
    %1372 = vmatprep.subr.mxu0 0.0
    %1373 = vmatpush1.msra.mxu0 0.0
    %1374 = vmatprep.subr.mxu0 0.0
    %1375 = vmatpush1.msra.mxu0 0.0
    %1376 = vmatprep.subr.mxu0 0.0
    %1377 = vmatpush1.msra.mxu0 0.0
    %1378 = vmatprep.subr.mxu0 0.0
    %1379 = vmatpush1.msra.mxu0 0.0
    %1380 = vmatprep.subr.mxu0 0.0
    %1381 = vmatpush1.msra.mxu0 0.0
    %1382 = vmatprep.subr.mxu0 0.0
    %1383 = vmatpush1.msra.mxu0 0.0
    %1384 = vmatprep.subr.mxu0 0.0
    %1385 = vmatpush1.msra.mxu0 0.0
    %1386 = vmatprep.subr.mxu0 0.0
    %1387 = vmatpush1.msra.mxu0 0.0
    %1388 = vmatprep.subr.mxu0 0.0
    %1389 = vmatpush1.msra.mxu0 0.0
    %1390 = vmatprep.subr.mxu0 0.0
    %1391 = vmatpush1.msra.mxu0 0.0
    %1392 = vmatprep.subr.mxu0 0.0
    %1393 = vmatpush1.msra.mxu0 0.0
    %1394 = vmatprep.subr.mxu0 0.0
    %1395 = vmatpush1.msra.mxu0 0.0
    %1396 = vmatprep.subr.mxu0 0.0
    %1397 = vmatpush1.msra.mxu0 0.0
    %1398 = vmatprep.subr.mxu0 0.0
    %1399 = vmatpush1.msra.mxu0 0.0
    %1400 = vmatprep.subr.mxu0 0.0
    %1401 = vmatpush1.msra.mxu0 0.0
    %1402 = vmatprep.subr.mxu0 0.0
    %1403 = vmatpush1.msra.mxu0 0.0
    %1404 = vmatprep.subr.mxu0 0.0
    %1405 = vmatpush1.msra.mxu0 0.0
    %1406 = vmatprep.subr.mxu0 0.0
    %1407 = vmatpush1.msra.mxu0 0.0
    %1408 = vmatprep.subr.mxu0 0.0
    %1409 = vmatpush1.msra.mxu0 0.0
    %1410 = vmatprep.subr.mxu0 0.0
    %1411 = vmatpush1.msra.mxu0 0.0
    %1412 = vmatprep.mubr.f32.mxu0 0.0
    %1413 = vmatmul.mubr.f32.gmra.mrb[0].mxu0 %v1343
    %v1414 = vpop.f32.mrb[0].mxu0
    %v1415 = vadd.f32 %v1340, %v1414
    %v1416 = vpop.f32.mrb[0].mxu0
    %1417 = vmatprep.mubr.f32.mxu0 0.0
    %1418 = vmatmul.mubr.f32.gmra.mrb[0].mxu0 %v1346
    %v1419 = vpop.f32.mrb[0].mxu0
    %v1420 = vadd.f32 %v1340, %v1419
    %v1421 = vpop.f32.mrb[0].mxu0
    %1422 = vdwg.mxu0
    %v1423 = vxor.u32 %v1415, 2147483648
    %v1424 = vxor.u32 %v1420, 2147483648
    %v1425 = vmul.f32 %v1423, 1.442695
    %v1426 = vpow.pop %v1425
    %v1427 = vmul.f32 %v1424, 1.442695
    %v1428 = vpow.pop %v1427
    %v1429 = vadd.f32 %v1426, 1.0
    %v1430 = vadd.f32 %v1428, 1.0
    %v1431 = vrcp.pop %v1429
    %v1432 = vmul.f32 1.0, %v1431
    %v1433 = vrcp.pop %v1430
    %v1434 = vmul.f32 1.0, %v1433
    %vm1435 = vcmask 64512
    %1436 = vst.msk [vmem:[#allocation8] sm:$0xff] %vm1435, %v1432
    %1437 = vst.msk [vmem:[#allocation8 + $0x8] sm:$0xff] %vm1435, %v1434
    // Predicated region
    $region34: #{tpu_custom_call.1} parent=1 // pred_check
      _
    $region35: #{tpu_custom_call.1} parent=1 // pred_check_branch
      %1439 = sbr.rel (0) target = $region37
    $region36: #{tpu_custom_call.1} parent=1 // pred_region
      %s1441 = ssub.s32 256, 256
      %1442 = vsyncadd [#allocation5], %s1441
      %s1443 = sshll.u32 [#allocation8], 4
      %s1444 = int_to_ptr.vmem [resolvable:$true] %s1443
      %1449 = dma.vmem_to_hbm [thread:$0]  %s1444, 256, %s6, [#allocation5], 128, 128, 8
    $region37: #{tpu_custom_call.1} parent=1 // pred_fallthru
      _
    // Predicated region
    $region38: #{tpu_custom_call.1} parent=1 // pred_check
      _
    $region39: #{tpu_custom_call.1} parent=1 // pred_check_branch
      %1451 = sbr.rel (0) target = $region41
    $region40: #{tpu_custom_call.1} parent=1 // pred_region
      %1452 = dma.done [#allocation5], 256
    $region41: #{tpu_custom_call.1} parent=1 // pred_fallthru
      _
    %1453 = vsyncpa [#allocation4], 1
    %1454 = vsyncpa [#allocation7], 1
    %1455 = vsyncpa [#allocation5], 1

</llo_original>
